<compile_context>
chip_gen: v6e
topology: v6e:2x2x1
jax: 0.10.0
libtpu: 0.0.40
codegen_flags: <defaults>
</compile_context>

<pallas_src>
import functools

import jax
import jax.numpy as jnp
from jax.experimental import pallas as pl
from jax.experimental.pallas import tpu as pltpu


# ------------------------------ Pallas kernel ------------------------------

def _layernorm_kernel(x_ref, a_ref, b_ref, o_ref, *, eps, inv_d, inv_dm1):
    # x_ref: (tm, D) tile in the input's native dtype; all math in f32.
    x = x_ref[...].astype(jnp.float32)
    mean = jnp.sum(x, axis=-1, keepdims=True) * inv_d
    xc = x - mean
    # Unbiased variance (torch.std default: N-1), centered form (no cancellation).
    var = jnp.sum(xc * xc, axis=-1, keepdims=True) * inv_dm1
    # eps is added to std (not var), matching the torch reference.  Exact
    # reciprocal over only (tm, 1) elements — cost is hidden under the DMA.
    inv = 1.0 / (jnp.sqrt(var) + eps)
    o_ref[...] = (xc * inv * a_ref[...] + b_ref[...]).astype(o_ref.dtype)


# ------------------------------ tiling heuristic ------------------------------

def _choose_block_rows(m, d, itemsize):
    sub = {4: 8, 2: 16, 1: 32}.get(itemsize, 8)   # sublane multiple per dtype
    # Whole input comfortably fits in one block -> single grid step (no loop
    # overhead; tiny kernels are launch/step-overhead dominated).
    if m * d * itemsize <= (2 << 20):
        return m
    # Target ~2 MiB native-dtype input tiles: per-step overhead (~0.35 us)
    # becomes negligible vs. DMA, while 2x(in+out) double-buffered tiles plus
    # the in-body f32 temporaries stay well under v5e's 16 MiB scoped VMEM and
    # v7x's 64 MiB physical VMEM.
    target = 2 << 20
    tm = max(sub, (target // (d * itemsize)) // sub * sub)
    # Keep >=4 grid steps so both v7x TensorCores get work and each can still
    # double-buffer.
    while tm > sub and pl.cdiv(m, tm) < 4:
        tm = max(sub, (tm // 2) // sub * sub)
    return min(tm, m)


# ------------------------------ module wrapper ------------------------------

class PallasLayerNorm:
    """LayerNorm(features) with unbiased std and eps added to std (torch ref)."""

    def __init__(self, a_2, b_2, eps=1e-6, block_rows=None):
        a = jnp.asarray(a_2, jnp.float32).reshape(-1)
        b = jnp.asarray(b_2, jnp.float32).reshape(-1)
        assert a.shape == b.shape and a.shape[0] >= 2
        self.d = int(a.shape[0])
        self.eps = float(eps)
        self.block_rows = block_rows          # optional manual override
        # Hoisted once: params as (1, D) f32, resident across grid steps.
        self.a = a.reshape(1, self.d)
        self.b = b.reshape(1, self.d)

    def __call__(self, x):
        orig_shape = x.shape
        d = orig_shape[-1]
        assert d == self.d, (d, self.d)

        # Contiguous (..., D) -> (rows, D): metadata-only reshape, no HBM pass.
        x2 = x.reshape(-1, d)
        m = x2.shape[0]
        itemsize = jnp.dtype(x.dtype).itemsize

        tm = self.block_rows or _choose_block_rows(m, d, itemsize)
        tm = min(int(tm), m)
        grid = pl.cdiv(m, tm)   # ragged last block: OOB rows discarded on store

        kern = functools.partial(
            _layernorm_kernel,
            eps=self.eps,
            inv_d=1.0 / d,
            inv_dm1=1.0 / (d - 1),
        )

        out = pl.pallas_call(
            kern,
            out_shape=jax.ShapeDtypeStruct((m, d), x.dtype),   # native dtype out
            grid=(grid,),
            in_specs=[
                pl.BlockSpec((tm, d), lambda i: (i, 0)),        # x tile
                pl.BlockSpec((1, d), lambda i: (0, 0)),         # a_2 (resident)
                pl.BlockSpec((1, d), lambda i: (0, 0)),         # b_2 (resident)
            ],
            out_specs=pl.BlockSpec((tm, d), lambda i: (i, 0)),
            compiler_params=pltpu.CompilerParams(
                dimension_semantics=("parallel",)),   # shards rows across TCs on v7x
        )(x2, self.a, self.b)

        return out.reshape(orig_shape)


# ------------------------------ pure-JAX reference ------------------------------

def ref_layernorm(x, a, b, eps=1e-6):
    x = x.astype(jnp.float32)
    mean = jnp.mean(x, axis=-1, keepdims=True)
    var = jnp.sum((x - mean) ** 2, axis=-1, keepdims=True) / (x.shape[-1] - 1)
    std = jnp.sqrt(var)
    return a * (x - mean) / (std + eps) + b


# ------------------------------ main ------------------------------

if __name__ == "__main__":
    key = jax.random.PRNGKey(0)
    ks = jax.random.split(key, 12)

    def check(x, a, b, tol, block_rows=None):
        ln = PallasLayerNorm(a, b, block_rows=block_rows)
        y = jax.block_until_ready(ln(x))
        r = ref_layernorm(x, a, b)
        assert y.shape == x.shape
        yf = y.astype(jnp.float32)
        assert bool(jnp.all(jnp.isfinite(yf)))
        err = float(jnp.max(jnp.abs(yf - r)))
        assert err < tol, err

    # Case 1: lane-dense D=128, f32, whole input in a single block.
    D = 128
    x1 = jax.random.normal(ks[0], (8, 64, D), jnp.float32)
    a1 = 1.0 + 0.1 * jax.random.normal(ks[1], (D,), jnp.float32)
    b1 = 0.1 * jax.random.normal(ks[2], (D,), jnp.float32)
    check(x1, a1, b1, 5e-4)

    # Case 2: odd feature width (AttnSleep d_model = 14), no lane padding.
    D2 = 14
    x2 = jax.random.normal(ks[3], (2, 16, D2), jnp.float32)
    a2 = 1.0 + 0.1 * jax.random.normal(ks[4], (D2,), jnp.float32)
    b2 = 0.1 * jax.random.normal(ks[5], (D2,), jnp.float32)
    check(x2, a2, b2, 5e-4)

    # Case 3: forced multi-step grid with a ragged last block (200 rows, tm=64).
    x3 = jax.random.normal(ks[6], (2, 100, D), jnp.float32)
    a3 = 1.0 + 0.1 * jax.random.normal(ks[7], (D,), jnp.float32)
    b3 = 0.1 * jax.random.normal(ks[8], (D,), jnp.float32)
    check(x3, a3, b3, 5e-4, block_rows=64)

    # Case 4: native bf16 I/O (kernel reads/writes bf16, computes in f32).
    x4 = jax.random.normal(ks[9], (4, 32, D), jnp.float32).astype(jnp.bfloat16)
    a4 = 1.0 + 0.1 * jax.random.normal(ks[10], (D,), jnp.float32)
    b4 = 0.1 * jax.random.normal(ks[11], (D,), jnp.float32)
    check(x4, a4, b4, 5e-2)

    print("KERNEL_OK")
</pallas_src>

<mosaic_0001>
module attributes {stable_mosaic.version = 11 : i64} {
  func.func @_layernorm_kernel(%arg0: i32, %arg1: memref<512x128xf32, #tpu.memory_space<vmem>>, %arg2: memref<1x128xf32, #tpu.memory_space<vmem>>, %arg3: memref<1x128xf32, #tpu.memory_space<vmem>>, %arg4: memref<512x128xf32, #tpu.memory_space<vmem>>) attributes {dimension_semantics = [#tpu.dimension_semantics<parallel>], iteration_bounds = array<i64: 1>, scalar_prefetch = 0 : i64, scratch_operands = 0 : i64, tpu.core_type = #tpu.core_type<tc>, window_params = [{transform_indices = @transform_0, window_bounds = array<i64: 512, 128>}, {pipeline_mode = #tpu.pipeline_mode<synchronous>, transform_indices = @transform_1, window_bounds = array<i64: 1, 128>}, {pipeline_mode = #tpu.pipeline_mode<synchronous>, transform_indices = @transform_2, window_bounds = array<i64: 1, 128>}, {transform_indices = @transform_3, window_bounds = array<i64: 512, 128>}]} {
    %c0 = arith.constant 0 : index
    %c0_0 = arith.constant 0 : index
    %0 = vector.load %arg1[%c0, %c0_0] : memref<512x128xf32, #tpu.memory_space<vmem>>, vector<512x128xf32>
    %cst = arith.constant dense<0.000000e+00> : vector<512xf32>
    %1 = vector.multi_reduction <add>, %0, %cst [1] : vector<512x128xf32> to vector<512xf32>
    %2 = vector.shape_cast %1 : vector<512xf32> to vector<512x1xf32>
    %cst_1 = arith.constant 7.812500e-03 : f32
    %3 = vector.broadcast %cst_1 : f32 to vector<512x1xf32>
    %4 = arith.mulf %2, %3 : vector<512x1xf32>
    %5 = vector.broadcast %4 : vector<512x1xf32> to vector<512x128xf32>
    %6 = arith.subf %0, %5 : vector<512x128xf32>
    %7 = arith.mulf %6, %6 : vector<512x128xf32>
    %cst_2 = arith.constant dense<0.000000e+00> : vector<512xf32>
    %8 = vector.multi_reduction <add>, %7, %cst_2 [1] : vector<512x128xf32> to vector<512xf32>
    %9 = vector.shape_cast %8 : vector<512xf32> to vector<512x1xf32>
    %cst_3 = arith.constant 0.00787401571 : f32
    %10 = vector.broadcast %cst_3 : f32 to vector<512x1xf32>
    %11 = arith.mulf %9, %10 : vector<512x1xf32>
    %12 = math.sqrt %11 : vector<512x1xf32>
    %cst_4 = arith.constant 9.99999997E-7 : f32
    %13 = vector.broadcast %cst_4 : f32 to vector<512x1xf32>
    %14 = arith.addf %12, %13 : vector<512x1xf32>
    %cst_5 = arith.constant 1.000000e+00 : f32
    %15 = vector.broadcast %cst_5 : f32 to vector<512x1xf32>
    %16 = arith.divf %15, %14 : vector<512x1xf32>
    %17 = vector.broadcast %16 : vector<512x1xf32> to vector<512x128xf32>
    %18 = arith.mulf %6, %17 : vector<512x128xf32>
    %c0_6 = arith.constant 0 : index
    %c0_7 = arith.constant 0 : index
    %19 = vector.load %arg2[%c0_6, %c0_7] : memref<1x128xf32, #tpu.memory_space<vmem>>, vector<1x128xf32>
    %20 = vector.broadcast %19 : vector<1x128xf32> to vector<512x128xf32>
    %21 = arith.mulf %18, %20 : vector<512x128xf32>
    %c0_8 = arith.constant 0 : index
    %c0_9 = arith.constant 0 : index
    %22 = vector.load %arg3[%c0_8, %c0_9] : memref<1x128xf32, #tpu.memory_space<vmem>>, vector<1x128xf32>
    %23 = vector.broadcast %22 : vector<1x128xf32> to vector<512x128xf32>
    %24 = arith.addf %21, %23 : vector<512x128xf32>
    %c0_10 = arith.constant 0 : index
    %c0_11 = arith.constant 0 : index
    %25 = vector.load %arg4[%c0_10, %c0_11] : memref<512x128xf32, #tpu.memory_space<vmem>>, vector<512x128xf32>
    tpu.vector_store %arg4[%c0_10, %c0_11], %24 {strides = array<i32>} : memref<512x128xf32, #tpu.memory_space<vmem>>, vector<512x128xf32>,
    return
  }
  func.func @transform_0(%arg0: i32) -> (i32, i32) {
    %c0_i32 = arith.constant 0 : i32
    %c0_i32_0 = arith.constant 0 : i32
    return %arg0, %c0_i32 : i32, i32
  }
  func.func @transform_1(%arg0: i32) -> (i32, i32) {
    %c0_i32 = arith.constant 0 : i32
    %c0_i32_0 = arith.constant 0 : i32
    %c0_i32_1 = arith.constant 0 : i32
    return %c0_i32, %c0_i32_0 : i32, i32
  }
  func.func @transform_2(%arg0: i32) -> (i32, i32) {
    %c0_i32 = arith.constant 0 : i32
    %c0_i32_0 = arith.constant 0 : i32
    %c0_i32_1 = arith.constant 0 : i32
    return %c0_i32, %c0_i32_0 : i32, i32
  }
  func.func @transform_3(%arg0: i32) -> (i32, i32) {
    %c0_i32 = arith.constant 0 : i32
    %c0_i32_0 = arith.constant 0 : i32
    return %arg0, %c0_i32 : i32, i32
  }
}

</mosaic_0001>

<llo_original>
// kernel: tpu_custom_call.1
$region0: #{tpu_custom_call.1}
  #allocation0 [shape = 'u32[]', space=smem, size = 0x4, offset = 0x4, fixed_abs, tag = 'smem constant byte address 0x4 - core index']
  #allocation1 [shape = 'u32[144,128]{1,0:T(1,128)}', space=vmem, size = 0x12000, scoped, tag = 'internal scratch']
  %s0 = inlined_call_operand.hbm [shape: f32[512,128], index: 0, kind: input, shape index: {}]
  %s1 = inlined_call_operand.vmem [shape: f32[1,128], index: 1, kind: input, shape index: {}]
  %s2 = inlined_call_operand.vmem [shape: f32[1,128], index: 2, kind: input, shape index: {}]
  %s3 = inlined_call_operand.hbm [shape: f32[512,128], index: 3, kind: output, shape index: {}]
  %s4 = sld [smem:[#allocation0]]
  $region26: #{tpu_custom_call.1} parent=0
    _
  %s6 = ssub.s32 1, %s4
  %s7 = scalar_select 0, %s6, %s4
  $region1: #{tpu_custom_call.1} parent=0
    #allocation2 [shape = 'u8[262144]{0}', space=vmem, size = 0x40000, scoped, tag = 'input window, operand 0, single buffered']
    #allocation3 [shape = 's32[1]{0}', space=sflag, size = 0x4, scoped, tag = 'scoped memory for tpu_custom_call.1']
    #allocation4 [shape = 's32[1]{0}', space=sflag, size = 0x4, scoped, tag = 'scoped memory for tpu_custom_call.1']
    #allocation5 [shape = 'u8[262144]{0}', space=vmem, size = 0x40000, scoped, tag = 'output window, operand 0, single buffered']
    %8 = vsyncpa [#allocation3], 0
    %9 = vsyncpa [#allocation4], 0
    // Predicated region
    $region2: #{tpu_custom_call.1} parent=1 // pred_check
      _
    $region3: #{tpu_custom_call.1} parent=1 // pred_check_branch
      %11 = sbr.rel (0) target = $region5
    $region4: #{tpu_custom_call.1} parent=1 // pred_region
      %s13 = ssub.s32 8192, 8192
      %14 = vsyncadd [#allocation3], %s13
      %s15 = sshll.u32 [#allocation2], 4
      %s16 = int_to_ptr.vmem [resolvable:$true] %s15
      %21 = dma.hbm_to_vmem [thread:$0]  %s0, 8192, %s16, [#allocation3], 128, 128, 8
    $region5: #{tpu_custom_call.1} parent=1 // pred_fallthru
      _
    // Predicated region
    $region6: #{tpu_custom_call.1} parent=1 // pred_check
      _
    $region7: #{tpu_custom_call.1} parent=1 // pred_check_branch
      %23 = sbr.rel (0) target = $region9
    $region8: #{tpu_custom_call.1} parent=1 // pred_region
      _
    $region9: #{tpu_custom_call.1} parent=1 // pred_fallthru
      _
    // Predicated region
    $region10: #{tpu_custom_call.1} parent=1 // pred_check
      _
    $region11: #{tpu_custom_call.1} parent=1 // pred_check_branch
      %25 = sbr.rel (0) target = $region13
    $region12: #{tpu_custom_call.1} parent=1 // pred_region
      _
    $region13: #{tpu_custom_call.1} parent=1 // pred_fallthru
      _
    // Predicated region
    $region14: #{tpu_custom_call.1} parent=1 // pred_check
      _
    $region15: #{tpu_custom_call.1} parent=1 // pred_check_branch
      %27 = sbr.rel (0) target = $region17
    $region16: #{tpu_custom_call.1} parent=1 // pred_region
      %28 = dma.done [#allocation3], 8192
    $region17: #{tpu_custom_call.1} parent=1 // pred_fallthru
      _
    %v29 = vld [vmem:[#allocation2] sm:$0xff]
    %v30 = vld [vmem:[#allocation2 + $0x8] sm:$0xff]
    %v31 = vld [vmem:[#allocation2 + $0x10] sm:$0xff]
    %v32 = vld [vmem:[#allocation2 + $0x18] sm:$0xff]
    %v33 = vld [vmem:[#allocation2 + $0x20] sm:$0xff]
    %v34 = vld [vmem:[#allocation2 + $0x28] sm:$0xff]
    %v35 = vld [vmem:[#allocation2 + $0x30] sm:$0xff]
    %v36 = vld [vmem:[#allocation2 + $0x38] sm:$0xff]
    %v37 = vld [vmem:[#allocation2 + $0x40] sm:$0xff]
    %v38 = vld [vmem:[#allocation2 + $0x48] sm:$0xff]
    %v39 = vld [vmem:[#allocation2 + $0x50] sm:$0xff]
    %v40 = vld [vmem:[#allocation2 + $0x58] sm:$0xff]
    %v41 = vld [vmem:[#allocation2 + $0x60] sm:$0xff]
    %v42 = vld [vmem:[#allocation2 + $0x68] sm:$0xff]
    %v43 = vld [vmem:[#allocation2 + $0x70] sm:$0xff]
    %v44 = vld [vmem:[#allocation2 + $0x78] sm:$0xff]
    %v45 = vld [vmem:[#allocation2 + $0x80] sm:$0xff]
    %v46 = vld [vmem:[#allocation2 + $0x88] sm:$0xff]
    %v47 = vld [vmem:[#allocation2 + $0x90] sm:$0xff]
    %v48 = vld [vmem:[#allocation2 + $0x98] sm:$0xff]
    %v49 = vld [vmem:[#allocation2 + $0xa0] sm:$0xff]
    %v50 = vld [vmem:[#allocation2 + $0xa8] sm:$0xff]
    %v51 = vld [vmem:[#allocation2 + $0xb0] sm:$0xff]
    %v52 = vld [vmem:[#allocation2 + $0xb8] sm:$0xff]
    %v53 = vld [vmem:[#allocation2 + $0xc0] sm:$0xff]
    %v54 = vld [vmem:[#allocation2 + $0xc8] sm:$0xff]
    %v55 = vld [vmem:[#allocation2 + $0xd0] sm:$0xff]
    %v56 = vld [vmem:[#allocation2 + $0xd8] sm:$0xff]
    %v57 = vld [vmem:[#allocation2 + $0xe0] sm:$0xff]
    %v58 = vld [vmem:[#allocation2 + $0xe8] sm:$0xff]
    %v59 = vld [vmem:[#allocation2 + $0xf0] sm:$0xff]
    %v60 = vld [vmem:[#allocation2 + $0xf8] sm:$0xff]
    %v61 = vld [vmem:[#allocation2 + $0x100] sm:$0xff]
    %v62 = vld [vmem:[#allocation2 + $0x108] sm:$0xff]
    %v63 = vld [vmem:[#allocation2 + $0x110] sm:$0xff]
    %v64 = vld [vmem:[#allocation2 + $0x118] sm:$0xff]
    %v65 = vld [vmem:[#allocation2 + $0x120] sm:$0xff]
    %v66 = vld [vmem:[#allocation2 + $0x128] sm:$0xff]
    %v67 = vld [vmem:[#allocation2 + $0x130] sm:$0xff]
    %v68 = vld [vmem:[#allocation2 + $0x138] sm:$0xff]
    %v69 = vld [vmem:[#allocation2 + $0x140] sm:$0xff]
    %v70 = vld [vmem:[#allocation2 + $0x148] sm:$0xff]
    %v71 = vld [vmem:[#allocation2 + $0x150] sm:$0xff]
    %v72 = vld [vmem:[#allocation2 + $0x158] sm:$0xff]
    %v73 = vld [vmem:[#allocation2 + $0x160] sm:$0xff]
    %v74 = vld [vmem:[#allocation2 + $0x168] sm:$0xff]
    %v75 = vld [vmem:[#allocation2 + $0x170] sm:$0xff]
    %v76 = vld [vmem:[#allocation2 + $0x178] sm:$0xff]
    %v77 = vld [vmem:[#allocation2 + $0x180] sm:$0xff]
    %v78 = vld [vmem:[#allocation2 + $0x188] sm:$0xff]
    %v79 = vld [vmem:[#allocation2 + $0x190] sm:$0xff]
    %v80 = vld [vmem:[#allocation2 + $0x198] sm:$0xff]
    %v81 = vld [vmem:[#allocation2 + $0x1a0] sm:$0xff]
    %v82 = vld [vmem:[#allocation2 + $0x1a8] sm:$0xff]
    %v83 = vld [vmem:[#allocation2 + $0x1b0] sm:$0xff]
    %v84 = vld [vmem:[#allocation2 + $0x1b8] sm:$0xff]
    %v85 = vld [vmem:[#allocation2 + $0x1c0] sm:$0xff]
    %v86 = vld [vmem:[#allocation2 + $0x1c8] sm:$0xff]
    %v87 = vld [vmem:[#allocation2 + $0x1d0] sm:$0xff]
    %v88 = vld [vmem:[#allocation2 + $0x1d8] sm:$0xff]
    %v89 = vld [vmem:[#allocation2 + $0x1e0] sm:$0xff]
    %v90 = vld [vmem:[#allocation2 + $0x1e8] sm:$0xff]
    %v91 = vld [vmem:[#allocation2 + $0x1f0] sm:$0xff]
    %v92 = vld [vmem:[#allocation2 + $0x1f8] sm:$0xff]
    %93 = vadd.xlane.f32.xlu0 %v29
    %v94 = vpop.xlane.xlu0 %93
    %95 = vadd.xlane.f32.xlu0 %v30
    %v96 = vpop.xlane.xlu0 %95
    %97 = vadd.xlane.f32.xlu0 %v31
    %v98 = vpop.xlane.xlu0 %97
    %99 = vadd.xlane.f32.xlu0 %v32
    %v100 = vpop.xlane.xlu0 %99
    %101 = vadd.xlane.f32.xlu0 %v33
    %v102 = vpop.xlane.xlu0 %101
    %103 = vadd.xlane.f32.xlu0 %v34
    %v104 = vpop.xlane.xlu0 %103
    %105 = vadd.xlane.f32.xlu0 %v35
    %v106 = vpop.xlane.xlu0 %105
    %107 = vadd.xlane.f32.xlu0 %v36
    %v108 = vpop.xlane.xlu0 %107
    %109 = vadd.xlane.f32.xlu0 %v37
    %v110 = vpop.xlane.xlu0 %109
    %111 = vadd.xlane.f32.xlu0 %v38
    %v112 = vpop.xlane.xlu0 %111
    %113 = vadd.xlane.f32.xlu0 %v39
    %v114 = vpop.xlane.xlu0 %113
    %115 = vadd.xlane.f32.xlu0 %v40
    %v116 = vpop.xlane.xlu0 %115
    %117 = vadd.xlane.f32.xlu0 %v41
    %v118 = vpop.xlane.xlu0 %117
    %119 = vadd.xlane.f32.xlu0 %v42
    %v120 = vpop.xlane.xlu0 %119
    %121 = vadd.xlane.f32.xlu0 %v43
    %v122 = vpop.xlane.xlu0 %121
    %123 = vadd.xlane.f32.xlu0 %v44
    %v124 = vpop.xlane.xlu0 %123
    %125 = vadd.xlane.f32.xlu0 %v45
    %v126 = vpop.xlane.xlu0 %125
    %127 = vadd.xlane.f32.xlu0 %v46
    %v128 = vpop.xlane.xlu0 %127
    %129 = vadd.xlane.f32.xlu0 %v47
    %v130 = vpop.xlane.xlu0 %129
    %131 = vadd.xlane.f32.xlu0 %v48
    %v132 = vpop.xlane.xlu0 %131
    %133 = vadd.xlane.f32.xlu0 %v49
    %v134 = vpop.xlane.xlu0 %133
    %135 = vadd.xlane.f32.xlu0 %v50
    %v136 = vpop.xlane.xlu0 %135
    %137 = vadd.xlane.f32.xlu0 %v51
    %v138 = vpop.xlane.xlu0 %137
    %139 = vadd.xlane.f32.xlu0 %v52
    %v140 = vpop.xlane.xlu0 %139
    %141 = vadd.xlane.f32.xlu0 %v53
    %v142 = vpop.xlane.xlu0 %141
    %143 = vadd.xlane.f32.xlu0 %v54
    %v144 = vpop.xlane.xlu0 %143
    %145 = vadd.xlane.f32.xlu0 %v55
    %v146 = vpop.xlane.xlu0 %145
    %147 = vadd.xlane.f32.xlu0 %v56
    %v148 = vpop.xlane.xlu0 %147
    %149 = vadd.xlane.f32.xlu0 %v57
    %v150 = vpop.xlane.xlu0 %149
    %151 = vadd.xlane.f32.xlu0 %v58
    %v152 = vpop.xlane.xlu0 %151
    %153 = vadd.xlane.f32.xlu0 %v59
    %v154 = vpop.xlane.xlu0 %153
    %155 = vadd.xlane.f32.xlu0 %v60
    %v156 = vpop.xlane.xlu0 %155
    %157 = vadd.xlane.f32.xlu0 %v61
    %v158 = vpop.xlane.xlu0 %157
    %159 = vadd.xlane.f32.xlu0 %v62
    %v160 = vpop.xlane.xlu0 %159
    %161 = vadd.xlane.f32.xlu0 %v63
    %v162 = vpop.xlane.xlu0 %161
    %163 = vadd.xlane.f32.xlu0 %v64
    %v164 = vpop.xlane.xlu0 %163
    %165 = vadd.xlane.f32.xlu0 %v65
    %v166 = vpop.xlane.xlu0 %165
    %167 = vadd.xlane.f32.xlu0 %v66
    %v168 = vpop.xlane.xlu0 %167
    %169 = vadd.xlane.f32.xlu0 %v67
    %v170 = vpop.xlane.xlu0 %169
    %171 = vadd.xlane.f32.xlu0 %v68
    %v172 = vpop.xlane.xlu0 %171
    %173 = vadd.xlane.f32.xlu0 %v69
    %v174 = vpop.xlane.xlu0 %173
    %175 = vadd.xlane.f32.xlu0 %v70
    %v176 = vpop.xlane.xlu0 %175
    %177 = vadd.xlane.f32.xlu0 %v71
    %v178 = vpop.xlane.xlu0 %177
    %179 = vadd.xlane.f32.xlu0 %v72
    %v180 = vpop.xlane.xlu0 %179
    %181 = vadd.xlane.f32.xlu0 %v73
    %v182 = vpop.xlane.xlu0 %181
    %183 = vadd.xlane.f32.xlu0 %v74
    %v184 = vpop.xlane.xlu0 %183
    %185 = vadd.xlane.f32.xlu0 %v75
    %v186 = vpop.xlane.xlu0 %185
    %187 = vadd.xlane.f32.xlu0 %v76
    %v188 = vpop.xlane.xlu0 %187
    %189 = vadd.xlane.f32.xlu0 %v77
    %v190 = vpop.xlane.xlu0 %189
    %191 = vadd.xlane.f32.xlu0 %v78
    %v192 = vpop.xlane.xlu0 %191
    %193 = vadd.xlane.f32.xlu0 %v79
    %v194 = vpop.xlane.xlu0 %193
    %195 = vadd.xlane.f32.xlu0 %v80
    %v196 = vpop.xlane.xlu0 %195
    %197 = vadd.xlane.f32.xlu0 %v81
    %v198 = vpop.xlane.xlu0 %197
    %199 = vadd.xlane.f32.xlu0 %v82
    %v200 = vpop.xlane.xlu0 %199
    %201 = vadd.xlane.f32.xlu0 %v83
    %v202 = vpop.xlane.xlu0 %201
    %203 = vadd.xlane.f32.xlu0 %v84
    %v204 = vpop.xlane.xlu0 %203
    %205 = vadd.xlane.f32.xlu0 %v85
    %v206 = vpop.xlane.xlu0 %205
    %207 = vadd.xlane.f32.xlu0 %v86
    %v208 = vpop.xlane.xlu0 %207
    %209 = vadd.xlane.f32.xlu0 %v87
    %v210 = vpop.xlane.xlu0 %209
    %211 = vadd.xlane.f32.xlu0 %v88
    %v212 = vpop.xlane.xlu0 %211
    %213 = vadd.xlane.f32.xlu0 %v89
    %v214 = vpop.xlane.xlu0 %213
    %215 = vadd.xlane.f32.xlu0 %v90
    %v216 = vpop.xlane.xlu0 %215
    %217 = vadd.xlane.f32.xlu0 %v91
    %v218 = vpop.xlane.xlu0 %217
    %219 = vadd.xlane.f32.xlu0 %v92
    %v220 = vpop.xlane.xlu0 %219
    %v221 = vmul.f32 %v94, 0.0078125
    %v222 = vmul.f32 %v96, 0.0078125
    %v223 = vmul.f32 %v98, 0.0078125
    %v224 = vmul.f32 %v100, 0.0078125
    %v225 = vmul.f32 %v102, 0.0078125
    %v226 = vmul.f32 %v104, 0.0078125
    %v227 = vmul.f32 %v106, 0.0078125
    %v228 = vmul.f32 %v108, 0.0078125
    %v229 = vmul.f32 %v110, 0.0078125
    %v230 = vmul.f32 %v112, 0.0078125
    %v231 = vmul.f32 %v114, 0.0078125
    %v232 = vmul.f32 %v116, 0.0078125
    %v233 = vmul.f32 %v118, 0.0078125
    %v234 = vmul.f32 %v120, 0.0078125
    %v235 = vmul.f32 %v122, 0.0078125
    %v236 = vmul.f32 %v124, 0.0078125
    %v237 = vmul.f32 %v126, 0.0078125
    %v238 = vmul.f32 %v128, 0.0078125
    %v239 = vmul.f32 %v130, 0.0078125
    %v240 = vmul.f32 %v132, 0.0078125
    %v241 = vmul.f32 %v134, 0.0078125
    %v242 = vmul.f32 %v136, 0.0078125
    %v243 = vmul.f32 %v138, 0.0078125
    %v244 = vmul.f32 %v140, 0.0078125
    %v245 = vmul.f32 %v142, 0.0078125
    %v246 = vmul.f32 %v144, 0.0078125
    %v247 = vmul.f32 %v146, 0.0078125
    %v248 = vmul.f32 %v148, 0.0078125
    %v249 = vmul.f32 %v150, 0.0078125
    %v250 = vmul.f32 %v152, 0.0078125
    %v251 = vmul.f32 %v154, 0.0078125
    %v252 = vmul.f32 %v156, 0.0078125
    %v253 = vmul.f32 %v158, 0.0078125
    %v254 = vmul.f32 %v160, 0.0078125
    %v255 = vmul.f32 %v162, 0.0078125
    %v256 = vmul.f32 %v164, 0.0078125
    %v257 = vmul.f32 %v166, 0.0078125
    %v258 = vmul.f32 %v168, 0.0078125
    %v259 = vmul.f32 %v170, 0.0078125
    %v260 = vmul.f32 %v172, 0.0078125
    %v261 = vmul.f32 %v174, 0.0078125
    %v262 = vmul.f32 %v176, 0.0078125
    %v263 = vmul.f32 %v178, 0.0078125
    %v264 = vmul.f32 %v180, 0.0078125
    %v265 = vmul.f32 %v182, 0.0078125
    %v266 = vmul.f32 %v184, 0.0078125
    %v267 = vmul.f32 %v186, 0.0078125
    %v268 = vmul.f32 %v188, 0.0078125
    %v269 = vmul.f32 %v190, 0.0078125
    %v270 = vmul.f32 %v192, 0.0078125
    %v271 = vmul.f32 %v194, 0.0078125
    %v272 = vmul.f32 %v196, 0.0078125
    %v273 = vmul.f32 %v198, 0.0078125
    %v274 = vmul.f32 %v200, 0.0078125
    %v275 = vmul.f32 %v202, 0.0078125
    %v276 = vmul.f32 %v204, 0.0078125
    %v277 = vmul.f32 %v206, 0.0078125
    %v278 = vmul.f32 %v208, 0.0078125
    %v279 = vmul.f32 %v210, 0.0078125
    %v280 = vmul.f32 %v212, 0.0078125
    %v281 = vmul.f32 %v214, 0.0078125
    %v282 = vmul.f32 %v216, 0.0078125
    %v283 = vmul.f32 %v218, 0.0078125
    %v284 = vmul.f32 %v220, 0.0078125
    %v285 = vsub.f32 %v29, %v221
    %v286 = vsub.f32 %v30, %v222
    %v287 = vsub.f32 %v31, %v223
    %v288 = vsub.f32 %v32, %v224
    %v289 = vsub.f32 %v33, %v225
    %v290 = vsub.f32 %v34, %v226
    %v291 = vsub.f32 %v35, %v227
    %v292 = vsub.f32 %v36, %v228
    %v293 = vsub.f32 %v37, %v229
    %v294 = vsub.f32 %v38, %v230
    %v295 = vsub.f32 %v39, %v231
    %v296 = vsub.f32 %v40, %v232
    %v297 = vsub.f32 %v41, %v233
    %v298 = vsub.f32 %v42, %v234
    %v299 = vsub.f32 %v43, %v235
    %v300 = vsub.f32 %v44, %v236
    %v301 = vsub.f32 %v45, %v237
    %v302 = vsub.f32 %v46, %v238
    %v303 = vsub.f32 %v47, %v239
    %v304 = vsub.f32 %v48, %v240
    %v305 = vsub.f32 %v49, %v241
    %v306 = vsub.f32 %v50, %v242
    %v307 = vsub.f32 %v51, %v243
    %v308 = vsub.f32 %v52, %v244
    %v309 = vsub.f32 %v53, %v245
    %v310 = vsub.f32 %v54, %v246
    %v311 = vsub.f32 %v55, %v247
    %v312 = vsub.f32 %v56, %v248
    %v313 = vsub.f32 %v57, %v249
    %v314 = vsub.f32 %v58, %v250
    %v315 = vsub.f32 %v59, %v251
    %v316 = vsub.f32 %v60, %v252
    %v317 = vsub.f32 %v61, %v253
    %v318 = vsub.f32 %v62, %v254
    %v319 = vsub.f32 %v63, %v255
    %v320 = vsub.f32 %v64, %v256
    %v321 = vsub.f32 %v65, %v257
    %v322 = vsub.f32 %v66, %v258
    %v323 = vsub.f32 %v67, %v259
    %v324 = vsub.f32 %v68, %v260
    %v325 = vsub.f32 %v69, %v261
    %v326 = vsub.f32 %v70, %v262
    %v327 = vsub.f32 %v71, %v263
    %v328 = vsub.f32 %v72, %v264
    %v329 = vsub.f32 %v73, %v265
    %v330 = vsub.f32 %v74, %v266
    %v331 = vsub.f32 %v75, %v267
    %v332 = vsub.f32 %v76, %v268
    %v333 = vsub.f32 %v77, %v269
    %v334 = vsub.f32 %v78, %v270
    %v335 = vsub.f32 %v79, %v271
    %v336 = vsub.f32 %v80, %v272
    %v337 = vsub.f32 %v81, %v273
    %v338 = vsub.f32 %v82, %v274
    %v339 = vsub.f32 %v83, %v275
    %v340 = vsub.f32 %v84, %v276
    %v341 = vsub.f32 %v85, %v277
    %v342 = vsub.f32 %v86, %v278
    %v343 = vsub.f32 %v87, %v279
    %v344 = vsub.f32 %v88, %v280
    %v345 = vsub.f32 %v89, %v281
    %v346 = vsub.f32 %v90, %v282
    %v347 = vsub.f32 %v91, %v283
    %v348 = vsub.f32 %v92, %v284
    %v349 = vmul.f32 %v285, %v285
    %v350 = vmul.f32 %v286, %v286
    %v351 = vmul.f32 %v287, %v287
    %v352 = vmul.f32 %v288, %v288
    %v353 = vmul.f32 %v289, %v289
    %v354 = vmul.f32 %v290, %v290
    %v355 = vmul.f32 %v291, %v291
    %v356 = vmul.f32 %v292, %v292
    %v357 = vmul.f32 %v293, %v293
    %v358 = vmul.f32 %v294, %v294
    %v359 = vmul.f32 %v295, %v295
    %v360 = vmul.f32 %v296, %v296
    %v361 = vmul.f32 %v297, %v297
    %v362 = vmul.f32 %v298, %v298
    %v363 = vmul.f32 %v299, %v299
    %v364 = vmul.f32 %v300, %v300
    %v365 = vmul.f32 %v301, %v301
    %v366 = vmul.f32 %v302, %v302
    %v367 = vmul.f32 %v303, %v303
    %v368 = vmul.f32 %v304, %v304
    %v369 = vmul.f32 %v305, %v305
    %v370 = vmul.f32 %v306, %v306
    %v371 = vmul.f32 %v307, %v307
    %v372 = vmul.f32 %v308, %v308
    %v373 = vmul.f32 %v309, %v309
    %v374 = vmul.f32 %v310, %v310
    %v375 = vmul.f32 %v311, %v311
    %v376 = vmul.f32 %v312, %v312
    %v377 = vmul.f32 %v313, %v313
    %v378 = vmul.f32 %v314, %v314
    %v379 = vmul.f32 %v315, %v315
    %v380 = vmul.f32 %v316, %v316
    %v381 = vmul.f32 %v317, %v317
    %v382 = vmul.f32 %v318, %v318
    %v383 = vmul.f32 %v319, %v319
    %v384 = vmul.f32 %v320, %v320
    %v385 = vmul.f32 %v321, %v321
    %v386 = vmul.f32 %v322, %v322
    %v387 = vmul.f32 %v323, %v323
    %v388 = vmul.f32 %v324, %v324
    %v389 = vmul.f32 %v325, %v325
    %v390 = vmul.f32 %v326, %v326
    %v391 = vmul.f32 %v327, %v327
    %v392 = vmul.f32 %v328, %v328
    %v393 = vmul.f32 %v329, %v329
    %v394 = vmul.f32 %v330, %v330
    %v395 = vmul.f32 %v331, %v331
    %v396 = vmul.f32 %v332, %v332
    %v397 = vmul.f32 %v333, %v333
    %v398 = vmul.f32 %v334, %v334
    %v399 = vmul.f32 %v335, %v335
    %v400 = vmul.f32 %v336, %v336
    %v401 = vmul.f32 %v337, %v337
    %v402 = vmul.f32 %v338, %v338
    %v403 = vmul.f32 %v339, %v339
    %v404 = vmul.f32 %v340, %v340
    %v405 = vmul.f32 %v341, %v341
    %v406 = vmul.f32 %v342, %v342
    %v407 = vmul.f32 %v343, %v343
    %v408 = vmul.f32 %v344, %v344
    %v409 = vmul.f32 %v345, %v345
    %v410 = vmul.f32 %v346, %v346
    %v411 = vmul.f32 %v347, %v347
    %v412 = vmul.f32 %v348, %v348
    %413 = vadd.xlane.f32.xlu0 %v349
    %v414 = vpop.xlane.xlu0 %413
    %415 = vadd.xlane.f32.xlu0 %v350
    %v416 = vpop.xlane.xlu0 %415
    %417 = vadd.xlane.f32.xlu0 %v351
    %v418 = vpop.xlane.xlu0 %417
    %419 = vadd.xlane.f32.xlu0 %v352
    %v420 = vpop.xlane.xlu0 %419
    %421 = vadd.xlane.f32.xlu0 %v353
    %v422 = vpop.xlane.xlu0 %421
    %423 = vadd.xlane.f32.xlu0 %v354
    %v424 = vpop.xlane.xlu0 %423
    %425 = vadd.xlane.f32.xlu0 %v355
    %v426 = vpop.xlane.xlu0 %425
    %427 = vadd.xlane.f32.xlu0 %v356
    %v428 = vpop.xlane.xlu0 %427
    %429 = vadd.xlane.f32.xlu0 %v357
    %v430 = vpop.xlane.xlu0 %429
    %431 = vadd.xlane.f32.xlu0 %v358
    %v432 = vpop.xlane.xlu0 %431
    %433 = vadd.xlane.f32.xlu0 %v359
    %v434 = vpop.xlane.xlu0 %433
    %435 = vadd.xlane.f32.xlu0 %v360
    %v436 = vpop.xlane.xlu0 %435
    %437 = vadd.xlane.f32.xlu0 %v361
    %v438 = vpop.xlane.xlu0 %437
    %439 = vadd.xlane.f32.xlu0 %v362
    %v440 = vpop.xlane.xlu0 %439
    %441 = vadd.xlane.f32.xlu0 %v363
    %v442 = vpop.xlane.xlu0 %441
    %443 = vadd.xlane.f32.xlu0 %v364
    %v444 = vpop.xlane.xlu0 %443
    %445 = vadd.xlane.f32.xlu0 %v365
    %v446 = vpop.xlane.xlu0 %445
    %447 = vadd.xlane.f32.xlu0 %v366
    %v448 = vpop.xlane.xlu0 %447
    %449 = vadd.xlane.f32.xlu0 %v367
    %v450 = vpop.xlane.xlu0 %449
    %451 = vadd.xlane.f32.xlu0 %v368
    %v452 = vpop.xlane.xlu0 %451
    %453 = vadd.xlane.f32.xlu0 %v369
    %v454 = vpop.xlane.xlu0 %453
    %455 = vadd.xlane.f32.xlu0 %v370
    %v456 = vpop.xlane.xlu0 %455
    %457 = vadd.xlane.f32.xlu0 %v371
    %v458 = vpop.xlane.xlu0 %457
    %459 = vadd.xlane.f32.xlu0 %v372
    %v460 = vpop.xlane.xlu0 %459
    %461 = vadd.xlane.f32.xlu0 %v373
    %v462 = vpop.xlane.xlu0 %461
    %463 = vadd.xlane.f32.xlu0 %v374
    %v464 = vpop.xlane.xlu0 %463
    %465 = vadd.xlane.f32.xlu0 %v375
    %v466 = vpop.xlane.xlu0 %465
    %467 = vadd.xlane.f32.xlu0 %v376
    %v468 = vpop.xlane.xlu0 %467
    %469 = vadd.xlane.f32.xlu0 %v377
    %v470 = vpop.xlane.xlu0 %469
    %471 = vadd.xlane.f32.xlu0 %v378
    %v472 = vpop.xlane.xlu0 %471
    %473 = vadd.xlane.f32.xlu0 %v379
    %v474 = vpop.xlane.xlu0 %473
    %475 = vadd.xlane.f32.xlu0 %v380
    %v476 = vpop.xlane.xlu0 %475
    %477 = vadd.xlane.f32.xlu0 %v381
    %v478 = vpop.xlane.xlu0 %477
    %479 = vadd.xlane.f32.xlu0 %v382
    %v480 = vpop.xlane.xlu0 %479
    %481 = vadd.xlane.f32.xlu0 %v383
    %v482 = vpop.xlane.xlu0 %481
    %483 = vadd.xlane.f32.xlu0 %v384
    %v484 = vpop.xlane.xlu0 %483
    %485 = vadd.xlane.f32.xlu0 %v385
    %v486 = vpop.xlane.xlu0 %485
    %487 = vadd.xlane.f32.xlu0 %v386
    %v488 = vpop.xlane.xlu0 %487
    %489 = vadd.xlane.f32.xlu0 %v387
    %v490 = vpop.xlane.xlu0 %489
    %491 = vadd.xlane.f32.xlu0 %v388
    %v492 = vpop.xlane.xlu0 %491
    %493 = vadd.xlane.f32.xlu0 %v389
    %v494 = vpop.xlane.xlu0 %493
    %495 = vadd.xlane.f32.xlu0 %v390
    %v496 = vpop.xlane.xlu0 %495
    %497 = vadd.xlane.f32.xlu0 %v391
    %v498 = vpop.xlane.xlu0 %497
    %499 = vadd.xlane.f32.xlu0 %v392
    %v500 = vpop.xlane.xlu0 %499
    %501 = vadd.xlane.f32.xlu0 %v393
    %v502 = vpop.xlane.xlu0 %501
    %503 = vadd.xlane.f32.xlu0 %v394
    %v504 = vpop.xlane.xlu0 %503
    %505 = vadd.xlane.f32.xlu0 %v395
    %v506 = vpop.xlane.xlu0 %505
    %507 = vadd.xlane.f32.xlu0 %v396
    %v508 = vpop.xlane.xlu0 %507
    %509 = vadd.xlane.f32.xlu0 %v397
    %v510 = vpop.xlane.xlu0 %509
    %511 = vadd.xlane.f32.xlu0 %v398
    %v512 = vpop.xlane.xlu0 %511
    %513 = vadd.xlane.f32.xlu0 %v399
    %v514 = vpop.xlane.xlu0 %513
    %515 = vadd.xlane.f32.xlu0 %v400
    %v516 = vpop.xlane.xlu0 %515
    %517 = vadd.xlane.f32.xlu0 %v401
    %v518 = vpop.xlane.xlu0 %517
    %519 = vadd.xlane.f32.xlu0 %v402
    %v520 = vpop.xlane.xlu0 %519
    %521 = vadd.xlane.f32.xlu0 %v403
    %v522 = vpop.xlane.xlu0 %521
    %523 = vadd.xlane.f32.xlu0 %v404
    %v524 = vpop.xlane.xlu0 %523
    %525 = vadd.xlane.f32.xlu0 %v405
    %v526 = vpop.xlane.xlu0 %525
    %527 = vadd.xlane.f32.xlu0 %v406
    %v528 = vpop.xlane.xlu0 %527
    %529 = vadd.xlane.f32.xlu0 %v407
    %v530 = vpop.xlane.xlu0 %529
    %531 = vadd.xlane.f32.xlu0 %v408
    %v532 = vpop.xlane.xlu0 %531
    %533 = vadd.xlane.f32.xlu0 %v409
    %v534 = vpop.xlane.xlu0 %533
    %535 = vadd.xlane.f32.xlu0 %v410
    %v536 = vpop.xlane.xlu0 %535
    %537 = vadd.xlane.f32.xlu0 %v411
    %v538 = vpop.xlane.xlu0 %537
    %539 = vadd.xlane.f32.xlu0 %v412
    %v540 = vpop.xlane.xlu0 %539
    %v541 = vmul.f32 %v414, 0.007874016
    %v542 = vmul.f32 %v416, 0.007874016
    %v543 = vmul.f32 %v418, 0.007874016
    %v544 = vmul.f32 %v420, 0.007874016
    %v545 = vmul.f32 %v422, 0.007874016
    %v546 = vmul.f32 %v424, 0.007874016
    %v547 = vmul.f32 %v426, 0.007874016
    %v548 = vmul.f32 %v428, 0.007874016
    %v549 = vmul.f32 %v430, 0.007874016
    %v550 = vmul.f32 %v432, 0.007874016
    %v551 = vmul.f32 %v434, 0.007874016
    %v552 = vmul.f32 %v436, 0.007874016
    %v553 = vmul.f32 %v438, 0.007874016
    %v554 = vmul.f32 %v440, 0.007874016
    %v555 = vmul.f32 %v442, 0.007874016
    %v556 = vmul.f32 %v444, 0.007874016
    %v557 = vmul.f32 %v446, 0.007874016
    %v558 = vmul.f32 %v448, 0.007874016
    %v559 = vmul.f32 %v450, 0.007874016
    %v560 = vmul.f32 %v452, 0.007874016
    %v561 = vmul.f32 %v454, 0.007874016
    %v562 = vmul.f32 %v456, 0.007874016
    %v563 = vmul.f32 %v458, 0.007874016
    %v564 = vmul.f32 %v460, 0.007874016
    %v565 = vmul.f32 %v462, 0.007874016
    %v566 = vmul.f32 %v464, 0.007874016
    %v567 = vmul.f32 %v466, 0.007874016
    %v568 = vmul.f32 %v468, 0.007874016
    %v569 = vmul.f32 %v470, 0.007874016
    %v570 = vmul.f32 %v472, 0.007874016
    %v571 = vmul.f32 %v474, 0.007874016
    %v572 = vmul.f32 %v476, 0.007874016
    %v573 = vmul.f32 %v478, 0.007874016
    %v574 = vmul.f32 %v480, 0.007874016
    %v575 = vmul.f32 %v482, 0.007874016
    %v576 = vmul.f32 %v484, 0.007874016
    %v577 = vmul.f32 %v486, 0.007874016
    %v578 = vmul.f32 %v488, 0.007874016
    %v579 = vmul.f32 %v490, 0.007874016
    %v580 = vmul.f32 %v492, 0.007874016
    %v581 = vmul.f32 %v494, 0.007874016
    %v582 = vmul.f32 %v496, 0.007874016
    %v583 = vmul.f32 %v498, 0.007874016
    %v584 = vmul.f32 %v500, 0.007874016
    %v585 = vmul.f32 %v502, 0.007874016
    %v586 = vmul.f32 %v504, 0.007874016
    %v587 = vmul.f32 %v506, 0.007874016
    %v588 = vmul.f32 %v508, 0.007874016
    %v589 = vmul.f32 %v510, 0.007874016
    %v590 = vmul.f32 %v512, 0.007874016
    %v591 = vmul.f32 %v514, 0.007874016
    %v592 = vmul.f32 %v516, 0.007874016
    %v593 = vmul.f32 %v518, 0.007874016
    %v594 = vmul.f32 %v520, 0.007874016
    %v595 = vmul.f32 %v522, 0.007874016
    %v596 = vmul.f32 %v524, 0.007874016
    %v597 = vmul.f32 %v526, 0.007874016
    %v598 = vmul.f32 %v528, 0.007874016
    %v599 = vmul.f32 %v530, 0.007874016
    %v600 = vmul.f32 %v532, 0.007874016
    %v601 = vmul.f32 %v534, 0.007874016
    %v602 = vmul.f32 %v536, 0.007874016
    %v603 = vmul.f32 %v538, 0.007874016
    %v604 = vmul.f32 %v540, 0.007874016
    %v605 = vrsqrt.pop %v541
    %v606 = vmul.f32 %v541, %v605
    %vm607 = vcmp.eq.f32.partialorder %v541, inf
    %v608 = vsel %vm607, %v541, %v606
    %vm609 = vcmp.eq.f32.partialorder %v541, 0.0
    %v610 = vand.u32 %v541, 2147483648
    %v611 = vsel %vm609, %v610, %v608
    %v612 = vrsqrt.pop %v542
    %v613 = vmul.f32 %v542, %v612
    %vm614 = vcmp.eq.f32.partialorder %v542, inf
    %v615 = vsel %vm614, %v542, %v613
    %vm616 = vcmp.eq.f32.partialorder %v542, 0.0
    %v617 = vand.u32 %v542, 2147483648
    %v618 = vsel %vm616, %v617, %v615
    %v619 = vrsqrt.pop %v543
    %v620 = vmul.f32 %v543, %v619
    %vm621 = vcmp.eq.f32.partialorder %v543, inf
    %v622 = vsel %vm621, %v543, %v620
    %vm623 = vcmp.eq.f32.partialorder %v543, 0.0
    %v624 = vand.u32 %v543, 2147483648
    %v625 = vsel %vm623, %v624, %v622
    %v626 = vrsqrt.pop %v544
    %v627 = vmul.f32 %v544, %v626
    %vm628 = vcmp.eq.f32.partialorder %v544, inf
    %v629 = vsel %vm628, %v544, %v627
    %vm630 = vcmp.eq.f32.partialorder %v544, 0.0
    %v631 = vand.u32 %v544, 2147483648
    %v632 = vsel %vm630, %v631, %v629
    %v633 = vrsqrt.pop %v545
    %v634 = vmul.f32 %v545, %v633
    %vm635 = vcmp.eq.f32.partialorder %v545, inf
    %v636 = vsel %vm635, %v545, %v634
    %vm637 = vcmp.eq.f32.partialorder %v545, 0.0
    %v638 = vand.u32 %v545, 2147483648
    %v639 = vsel %vm637, %v638, %v636
    %v640 = vrsqrt.pop %v546
    %v641 = vmul.f32 %v546, %v640
    %vm642 = vcmp.eq.f32.partialorder %v546, inf
    %v643 = vsel %vm642, %v546, %v641
    %vm644 = vcmp.eq.f32.partialorder %v546, 0.0
    %v645 = vand.u32 %v546, 2147483648
    %v646 = vsel %vm644, %v645, %v643
    %v647 = vrsqrt.pop %v547
    %v648 = vmul.f32 %v547, %v647
    %vm649 = vcmp.eq.f32.partialorder %v547, inf
    %v650 = vsel %vm649, %v547, %v648
    %vm651 = vcmp.eq.f32.partialorder %v547, 0.0
    %v652 = vand.u32 %v547, 2147483648
    %v653 = vsel %vm651, %v652, %v650
    %v654 = vrsqrt.pop %v548
    %v655 = vmul.f32 %v548, %v654
    %vm656 = vcmp.eq.f32.partialorder %v548, inf
    %v657 = vsel %vm656, %v548, %v655
    %vm658 = vcmp.eq.f32.partialorder %v548, 0.0
    %v659 = vand.u32 %v548, 2147483648
    %v660 = vsel %vm658, %v659, %v657
    %v661 = vrsqrt.pop %v549
    %v662 = vmul.f32 %v549, %v661
    %vm663 = vcmp.eq.f32.partialorder %v549, inf
    %v664 = vsel %vm663, %v549, %v662
    %vm665 = vcmp.eq.f32.partialorder %v549, 0.0
    %v666 = vand.u32 %v549, 2147483648
    %v667 = vsel %vm665, %v666, %v664
    %v668 = vrsqrt.pop %v550
    %v669 = vmul.f32 %v550, %v668
    %vm670 = vcmp.eq.f32.partialorder %v550, inf
    %v671 = vsel %vm670, %v550, %v669
    %vm672 = vcmp.eq.f32.partialorder %v550, 0.0
    %v673 = vand.u32 %v550, 2147483648
    %v674 = vsel %vm672, %v673, %v671
    %v675 = vrsqrt.pop %v551
    %v676 = vmul.f32 %v551, %v675
    %vm677 = vcmp.eq.f32.partialorder %v551, inf
    %v678 = vsel %vm677, %v551, %v676
    %vm679 = vcmp.eq.f32.partialorder %v551, 0.0
    %v680 = vand.u32 %v551, 2147483648
    %v681 = vsel %vm679, %v680, %v678
    %v682 = vrsqrt.pop %v552
    %v683 = vmul.f32 %v552, %v682
    %vm684 = vcmp.eq.f32.partialorder %v552, inf
    %v685 = vsel %vm684, %v552, %v683
    %vm686 = vcmp.eq.f32.partialorder %v552, 0.0
    %v687 = vand.u32 %v552, 2147483648
    %v688 = vsel %vm686, %v687, %v685
    %v689 = vrsqrt.pop %v553
    %v690 = vmul.f32 %v553, %v689
    %vm691 = vcmp.eq.f32.partialorder %v553, inf
    %v692 = vsel %vm691, %v553, %v690
    %vm693 = vcmp.eq.f32.partialorder %v553, 0.0
    %v694 = vand.u32 %v553, 2147483648
    %v695 = vsel %vm693, %v694, %v692
    %v696 = vrsqrt.pop %v554
    %v697 = vmul.f32 %v554, %v696
    %vm698 = vcmp.eq.f32.partialorder %v554, inf
    %v699 = vsel %vm698, %v554, %v697
    %vm700 = vcmp.eq.f32.partialorder %v554, 0.0
    %v701 = vand.u32 %v554, 2147483648
    %v702 = vsel %vm700, %v701, %v699
    %v703 = vrsqrt.pop %v555
    %v704 = vmul.f32 %v555, %v703
    %vm705 = vcmp.eq.f32.partialorder %v555, inf
    %v706 = vsel %vm705, %v555, %v704
    %vm707 = vcmp.eq.f32.partialorder %v555, 0.0
    %v708 = vand.u32 %v555, 2147483648
    %v709 = vsel %vm707, %v708, %v706
    %v710 = vrsqrt.pop %v556
    %v711 = vmul.f32 %v556, %v710
    %vm712 = vcmp.eq.f32.partialorder %v556, inf
    %v713 = vsel %vm712, %v556, %v711
    %vm714 = vcmp.eq.f32.partialorder %v556, 0.0
    %v715 = vand.u32 %v556, 2147483648
    %v716 = vsel %vm714, %v715, %v713
    %v717 = vrsqrt.pop %v557
    %v718 = vmul.f32 %v557, %v717
    %vm719 = vcmp.eq.f32.partialorder %v557, inf
    %v720 = vsel %vm719, %v557, %v718
    %vm721 = vcmp.eq.f32.partialorder %v557, 0.0
    %v722 = vand.u32 %v557, 2147483648
    %v723 = vsel %vm721, %v722, %v720
    %v724 = vrsqrt.pop %v558
    %v725 = vmul.f32 %v558, %v724
    %vm726 = vcmp.eq.f32.partialorder %v558, inf
    %v727 = vsel %vm726, %v558, %v725
    %vm728 = vcmp.eq.f32.partialorder %v558, 0.0
    %v729 = vand.u32 %v558, 2147483648
    %v730 = vsel %vm728, %v729, %v727
    %v731 = vrsqrt.pop %v559
    %v732 = vmul.f32 %v559, %v731
    %vm733 = vcmp.eq.f32.partialorder %v559, inf
    %v734 = vsel %vm733, %v559, %v732
    %vm735 = vcmp.eq.f32.partialorder %v559, 0.0
    %v736 = vand.u32 %v559, 2147483648
    %v737 = vsel %vm735, %v736, %v734
    %v738 = vrsqrt.pop %v560
    %v739 = vmul.f32 %v560, %v738
    %vm740 = vcmp.eq.f32.partialorder %v560, inf
    %v741 = vsel %vm740, %v560, %v739
    %vm742 = vcmp.eq.f32.partialorder %v560, 0.0
    %v743 = vand.u32 %v560, 2147483648
    %v744 = vsel %vm742, %v743, %v741
    %v745 = vrsqrt.pop %v561
    %v746 = vmul.f32 %v561, %v745
    %vm747 = vcmp.eq.f32.partialorder %v561, inf
    %v748 = vsel %vm747, %v561, %v746
    %vm749 = vcmp.eq.f32.partialorder %v561, 0.0
    %v750 = vand.u32 %v561, 2147483648
    %v751 = vsel %vm749, %v750, %v748
    %v752 = vrsqrt.pop %v562
    %v753 = vmul.f32 %v562, %v752
    %vm754 = vcmp.eq.f32.partialorder %v562, inf
    %v755 = vsel %vm754, %v562, %v753
    %vm756 = vcmp.eq.f32.partialorder %v562, 0.0
    %v757 = vand.u32 %v562, 2147483648
    %v758 = vsel %vm756, %v757, %v755
    %v759 = vrsqrt.pop %v563
    %v760 = vmul.f32 %v563, %v759
    %vm761 = vcmp.eq.f32.partialorder %v563, inf
    %v762 = vsel %vm761, %v563, %v760
    %vm763 = vcmp.eq.f32.partialorder %v563, 0.0
    %v764 = vand.u32 %v563, 2147483648
    %v765 = vsel %vm763, %v764, %v762
    %v766 = vrsqrt.pop %v564
    %v767 = vmul.f32 %v564, %v766
    %vm768 = vcmp.eq.f32.partialorder %v564, inf
    %v769 = vsel %vm768, %v564, %v767
    %vm770 = vcmp.eq.f32.partialorder %v564, 0.0
    %v771 = vand.u32 %v564, 2147483648
    %v772 = vsel %vm770, %v771, %v769
    %v773 = vrsqrt.pop %v565
    %v774 = vmul.f32 %v565, %v773
    %vm775 = vcmp.eq.f32.partialorder %v565, inf
    %v776 = vsel %vm775, %v565, %v774
    %vm777 = vcmp.eq.f32.partialorder %v565, 0.0
    %v778 = vand.u32 %v565, 2147483648
    %v779 = vsel %vm777, %v778, %v776
    %v780 = vrsqrt.pop %v566
    %v781 = vmul.f32 %v566, %v780
    %vm782 = vcmp.eq.f32.partialorder %v566, inf
    %v783 = vsel %vm782, %v566, %v781
    %vm784 = vcmp.eq.f32.partialorder %v566, 0.0
    %v785 = vand.u32 %v566, 2147483648
    %v786 = vsel %vm784, %v785, %v783
    %v787 = vrsqrt.pop %v567
    %v788 = vmul.f32 %v567, %v787
    %vm789 = vcmp.eq.f32.partialorder %v567, inf
    %v790 = vsel %vm789, %v567, %v788
    %vm791 = vcmp.eq.f32.partialorder %v567, 0.0
    %v792 = vand.u32 %v567, 2147483648
    %v793 = vsel %vm791, %v792, %v790
    %v794 = vrsqrt.pop %v568
    %v795 = vmul.f32 %v568, %v794
    %vm796 = vcmp.eq.f32.partialorder %v568, inf
    %v797 = vsel %vm796, %v568, %v795
    %vm798 = vcmp.eq.f32.partialorder %v568, 0.0
    %v799 = vand.u32 %v568, 2147483648
    %v800 = vsel %vm798, %v799, %v797
    %v801 = vrsqrt.pop %v569
    %v802 = vmul.f32 %v569, %v801
    %vm803 = vcmp.eq.f32.partialorder %v569, inf
    %v804 = vsel %vm803, %v569, %v802
    %vm805 = vcmp.eq.f32.partialorder %v569, 0.0
    %v806 = vand.u32 %v569, 2147483648
    %v807 = vsel %vm805, %v806, %v804
    %v808 = vrsqrt.pop %v570
    %v809 = vmul.f32 %v570, %v808
    %vm810 = vcmp.eq.f32.partialorder %v570, inf
    %v811 = vsel %vm810, %v570, %v809
    %vm812 = vcmp.eq.f32.partialorder %v570, 0.0
    %v813 = vand.u32 %v570, 2147483648
    %v814 = vsel %vm812, %v813, %v811
    %v815 = vrsqrt.pop %v571
    %v816 = vmul.f32 %v571, %v815
    %vm817 = vcmp.eq.f32.partialorder %v571, inf
    %v818 = vsel %vm817, %v571, %v816
    %vm819 = vcmp.eq.f32.partialorder %v571, 0.0
    %v820 = vand.u32 %v571, 2147483648
    %v821 = vsel %vm819, %v820, %v818
    %v822 = vrsqrt.pop %v572
    %v823 = vmul.f32 %v572, %v822
    %vm824 = vcmp.eq.f32.partialorder %v572, inf
    %v825 = vsel %vm824, %v572, %v823
    %vm826 = vcmp.eq.f32.partialorder %v572, 0.0
    %v827 = vand.u32 %v572, 2147483648
    %v828 = vsel %vm826, %v827, %v825
    %v829 = vrsqrt.pop %v573
    %v830 = vmul.f32 %v573, %v829
    %vm831 = vcmp.eq.f32.partialorder %v573, inf
    %v832 = vsel %vm831, %v573, %v830
    %vm833 = vcmp.eq.f32.partialorder %v573, 0.0
    %v834 = vand.u32 %v573, 2147483648
    %v835 = vsel %vm833, %v834, %v832
    %v836 = vrsqrt.pop %v574
    %v837 = vmul.f32 %v574, %v836
    %vm838 = vcmp.eq.f32.partialorder %v574, inf
    %v839 = vsel %vm838, %v574, %v837
    %vm840 = vcmp.eq.f32.partialorder %v574, 0.0
    %v841 = vand.u32 %v574, 2147483648
    %v842 = vsel %vm840, %v841, %v839
    %v843 = vrsqrt.pop %v575
    %v844 = vmul.f32 %v575, %v843
    %vm845 = vcmp.eq.f32.partialorder %v575, inf
    %v846 = vsel %vm845, %v575, %v844
    %vm847 = vcmp.eq.f32.partialorder %v575, 0.0
    %v848 = vand.u32 %v575, 2147483648
    %v849 = vsel %vm847, %v848, %v846
    %v850 = vrsqrt.pop %v576
    %v851 = vmul.f32 %v576, %v850
    %vm852 = vcmp.eq.f32.partialorder %v576, inf
    %v853 = vsel %vm852, %v576, %v851
    %vm854 = vcmp.eq.f32.partialorder %v576, 0.0
    %v855 = vand.u32 %v576, 2147483648
    %v856 = vsel %vm854, %v855, %v853
    %v857 = vrsqrt.pop %v577
    %v858 = vmul.f32 %v577, %v857
    %vm859 = vcmp.eq.f32.partialorder %v577, inf
    %v860 = vsel %vm859, %v577, %v858
    %vm861 = vcmp.eq.f32.partialorder %v577, 0.0
    %v862 = vand.u32 %v577, 2147483648
    %v863 = vsel %vm861, %v862, %v860
    %v864 = vrsqrt.pop %v578
    %v865 = vmul.f32 %v578, %v864
    %vm866 = vcmp.eq.f32.partialorder %v578, inf
    %v867 = vsel %vm866, %v578, %v865
    %vm868 = vcmp.eq.f32.partialorder %v578, 0.0
    %v869 = vand.u32 %v578, 2147483648
    %v870 = vsel %vm868, %v869, %v867
    %v871 = vrsqrt.pop %v579
    %v872 = vmul.f32 %v579, %v871
    %vm873 = vcmp.eq.f32.partialorder %v579, inf
    %v874 = vsel %vm873, %v579, %v872
    %vm875 = vcmp.eq.f32.partialorder %v579, 0.0
    %v876 = vand.u32 %v579, 2147483648
    %v877 = vsel %vm875, %v876, %v874
    %v878 = vrsqrt.pop %v580
    %v879 = vmul.f32 %v580, %v878
    %vm880 = vcmp.eq.f32.partialorder %v580, inf
    %v881 = vsel %vm880, %v580, %v879
    %vm882 = vcmp.eq.f32.partialorder %v580, 0.0
    %v883 = vand.u32 %v580, 2147483648
    %v884 = vsel %vm882, %v883, %v881
    %v885 = vrsqrt.pop %v581
    %v886 = vmul.f32 %v581, %v885
    %vm887 = vcmp.eq.f32.partialorder %v581, inf
    %v888 = vsel %vm887, %v581, %v886
    %vm889 = vcmp.eq.f32.partialorder %v581, 0.0
    %v890 = vand.u32 %v581, 2147483648
    %v891 = vsel %vm889, %v890, %v888
    %v892 = vrsqrt.pop %v582
    %v893 = vmul.f32 %v582, %v892
    %vm894 = vcmp.eq.f32.partialorder %v582, inf
    %v895 = vsel %vm894, %v582, %v893
    %vm896 = vcmp.eq.f32.partialorder %v582, 0.0
    %v897 = vand.u32 %v582, 2147483648
    %v898 = vsel %vm896, %v897, %v895
    %v899 = vrsqrt.pop %v583
    %v900 = vmul.f32 %v583, %v899
    %vm901 = vcmp.eq.f32.partialorder %v583, inf
    %v902 = vsel %vm901, %v583, %v900
    %vm903 = vcmp.eq.f32.partialorder %v583, 0.0
    %v904 = vand.u32 %v583, 2147483648
    %v905 = vsel %vm903, %v904, %v902
    %v906 = vrsqrt.pop %v584
    %v907 = vmul.f32 %v584, %v906
    %vm908 = vcmp.eq.f32.partialorder %v584, inf
    %v909 = vsel %vm908, %v584, %v907
    %vm910 = vcmp.eq.f32.partialorder %v584, 0.0
    %v911 = vand.u32 %v584, 2147483648
    %v912 = vsel %vm910, %v911, %v909
    %v913 = vrsqrt.pop %v585
    %v914 = vmul.f32 %v585, %v913
    %vm915 = vcmp.eq.f32.partialorder %v585, inf
    %v916 = vsel %vm915, %v585, %v914
    %vm917 = vcmp.eq.f32.partialorder %v585, 0.0
    %v918 = vand.u32 %v585, 2147483648
    %v919 = vsel %vm917, %v918, %v916
    %v920 = vrsqrt.pop %v586
    %v921 = vmul.f32 %v586, %v920
    %vm922 = vcmp.eq.f32.partialorder %v586, inf
    %v923 = vsel %vm922, %v586, %v921
    %vm924 = vcmp.eq.f32.partialorder %v586, 0.0
    %v925 = vand.u32 %v586, 2147483648
    %v926 = vsel %vm924, %v925, %v923
    %v927 = vrsqrt.pop %v587
    %v928 = vmul.f32 %v587, %v927
    %vm929 = vcmp.eq.f32.partialorder %v587, inf
    %v930 = vsel %vm929, %v587, %v928
    %vm931 = vcmp.eq.f32.partialorder %v587, 0.0
    %v932 = vand.u32 %v587, 2147483648
    %v933 = vsel %vm931, %v932, %v930
    %v934 = vrsqrt.pop %v588
    %v935 = vmul.f32 %v588, %v934
    %vm936 = vcmp.eq.f32.partialorder %v588, inf
    %v937 = vsel %vm936, %v588, %v935
    %vm938 = vcmp.eq.f32.partialorder %v588, 0.0
    %v939 = vand.u32 %v588, 2147483648
    %v940 = vsel %vm938, %v939, %v937
    %v941 = vrsqrt.pop %v589
    %v942 = vmul.f32 %v589, %v941
    %vm943 = vcmp.eq.f32.partialorder %v589, inf
    %v944 = vsel %vm943, %v589, %v942
    %vm945 = vcmp.eq.f32.partialorder %v589, 0.0
    %v946 = vand.u32 %v589, 2147483648
    %v947 = vsel %vm945, %v946, %v944
    %v948 = vrsqrt.pop %v590
    %v949 = vmul.f32 %v590, %v948
    %vm950 = vcmp.eq.f32.partialorder %v590, inf
    %v951 = vsel %vm950, %v590, %v949
    %vm952 = vcmp.eq.f32.partialorder %v590, 0.0
    %v953 = vand.u32 %v590, 2147483648
    %v954 = vsel %vm952, %v953, %v951
    %v955 = vrsqrt.pop %v591
    %v956 = vmul.f32 %v591, %v955
    %vm957 = vcmp.eq.f32.partialorder %v591, inf
    %v958 = vsel %vm957, %v591, %v956
    %vm959 = vcmp.eq.f32.partialorder %v591, 0.0
    %v960 = vand.u32 %v591, 2147483648
    %v961 = vsel %vm959, %v960, %v958
    %v962 = vrsqrt.pop %v592
    %v963 = vmul.f32 %v592, %v962
    %vm964 = vcmp.eq.f32.partialorder %v592, inf
    %v965 = vsel %vm964, %v592, %v963
    %vm966 = vcmp.eq.f32.partialorder %v592, 0.0
    %v967 = vand.u32 %v592, 2147483648
    %v968 = vsel %vm966, %v967, %v965
    %v969 = vrsqrt.pop %v593
    %v970 = vmul.f32 %v593, %v969
    %vm971 = vcmp.eq.f32.partialorder %v593, inf
    %v972 = vsel %vm971, %v593, %v970
    %vm973 = vcmp.eq.f32.partialorder %v593, 0.0
    %v974 = vand.u32 %v593, 2147483648
    %v975 = vsel %vm973, %v974, %v972
    %v976 = vrsqrt.pop %v594
    %v977 = vmul.f32 %v594, %v976
    %vm978 = vcmp.eq.f32.partialorder %v594, inf
    %v979 = vsel %vm978, %v594, %v977
    %vm980 = vcmp.eq.f32.partialorder %v594, 0.0
    %v981 = vand.u32 %v594, 2147483648
    %v982 = vsel %vm980, %v981, %v979
    %v983 = vrsqrt.pop %v595
    %v984 = vmul.f32 %v595, %v983
    %vm985 = vcmp.eq.f32.partialorder %v595, inf
    %v986 = vsel %vm985, %v595, %v984
    %vm987 = vcmp.eq.f32.partialorder %v595, 0.0
    %v988 = vand.u32 %v595, 2147483648
    %v989 = vsel %vm987, %v988, %v986
    %v990 = vrsqrt.pop %v596
    %v991 = vmul.f32 %v596, %v990
    %vm992 = vcmp.eq.f32.partialorder %v596, inf
    %v993 = vsel %vm992, %v596, %v991
    %vm994 = vcmp.eq.f32.partialorder %v596, 0.0
    %v995 = vand.u32 %v596, 2147483648
    %v996 = vsel %vm994, %v995, %v993
    %v997 = vrsqrt.pop %v597
    %v998 = vmul.f32 %v597, %v997
    %vm999 = vcmp.eq.f32.partialorder %v597, inf
    %v1000 = vsel %vm999, %v597, %v998
    %vm1001 = vcmp.eq.f32.partialorder %v597, 0.0
    %v1002 = vand.u32 %v597, 2147483648
    %v1003 = vsel %vm1001, %v1002, %v1000
    %v1004 = vrsqrt.pop %v598
    %v1005 = vmul.f32 %v598, %v1004
    %vm1006 = vcmp.eq.f32.partialorder %v598, inf
    %v1007 = vsel %vm1006, %v598, %v1005
    %vm1008 = vcmp.eq.f32.partialorder %v598, 0.0
    %v1009 = vand.u32 %v598, 2147483648
    %v1010 = vsel %vm1008, %v1009, %v1007
    %v1011 = vrsqrt.pop %v599
    %v1012 = vmul.f32 %v599, %v1011
    %vm1013 = vcmp.eq.f32.partialorder %v599, inf
    %v1014 = vsel %vm1013, %v599, %v1012
    %vm1015 = vcmp.eq.f32.partialorder %v599, 0.0
    %v1016 = vand.u32 %v599, 2147483648
    %v1017 = vsel %vm1015, %v1016, %v1014
    %v1018 = vrsqrt.pop %v600
    %v1019 = vmul.f32 %v600, %v1018
    %vm1020 = vcmp.eq.f32.partialorder %v600, inf
    %v1021 = vsel %vm1020, %v600, %v1019
    %vm1022 = vcmp.eq.f32.partialorder %v600, 0.0
    %v1023 = vand.u32 %v600, 2147483648
    %v1024 = vsel %vm1022, %v1023, %v1021
    %v1025 = vrsqrt.pop %v601
    %v1026 = vmul.f32 %v601, %v1025
    %vm1027 = vcmp.eq.f32.partialorder %v601, inf
    %v1028 = vsel %vm1027, %v601, %v1026
    %vm1029 = vcmp.eq.f32.partialorder %v601, 0.0
    %v1030 = vand.u32 %v601, 2147483648
    %v1031 = vsel %vm1029, %v1030, %v1028
    %v1032 = vrsqrt.pop %v602
    %v1033 = vmul.f32 %v602, %v1032
    %vm1034 = vcmp.eq.f32.partialorder %v602, inf
    %v1035 = vsel %vm1034, %v602, %v1033
    %vm1036 = vcmp.eq.f32.partialorder %v602, 0.0
    %v1037 = vand.u32 %v602, 2147483648
    %v1038 = vsel %vm1036, %v1037, %v1035
    %v1039 = vrsqrt.pop %v603
    %v1040 = vmul.f32 %v603, %v1039
    %vm1041 = vcmp.eq.f32.partialorder %v603, inf
    %v1042 = vsel %vm1041, %v603, %v1040
    %vm1043 = vcmp.eq.f32.partialorder %v603, 0.0
    %v1044 = vand.u32 %v603, 2147483648
    %v1045 = vsel %vm1043, %v1044, %v1042
    %v1046 = vrsqrt.pop %v604
    %v1047 = vmul.f32 %v604, %v1046
    %vm1048 = vcmp.eq.f32.partialorder %v604, inf
    %v1049 = vsel %vm1048, %v604, %v1047
    %vm1050 = vcmp.eq.f32.partialorder %v604, 0.0
    %v1051 = vand.u32 %v604, 2147483648
    %v1052 = vsel %vm1050, %v1051, %v1049
    %v1053 = vadd.f32 %v611, 1e-06
    %v1054 = vadd.f32 %v618, 1e-06
    %v1055 = vadd.f32 %v625, 1e-06
    %v1056 = vadd.f32 %v632, 1e-06
    %v1057 = vadd.f32 %v639, 1e-06
    %v1058 = vadd.f32 %v646, 1e-06
    %v1059 = vadd.f32 %v653, 1e-06
    %v1060 = vadd.f32 %v660, 1e-06
    %v1061 = vadd.f32 %v667, 1e-06
    %v1062 = vadd.f32 %v674, 1e-06
    %v1063 = vadd.f32 %v681, 1e-06
    %v1064 = vadd.f32 %v688, 1e-06
    %v1065 = vadd.f32 %v695, 1e-06
    %v1066 = vadd.f32 %v702, 1e-06
    %v1067 = vadd.f32 %v709, 1e-06
    %v1068 = vadd.f32 %v716, 1e-06
    %v1069 = vadd.f32 %v723, 1e-06
    %v1070 = vadd.f32 %v730, 1e-06
    %v1071 = vadd.f32 %v737, 1e-06
    %v1072 = vadd.f32 %v744, 1e-06
    %v1073 = vadd.f32 %v751, 1e-06
    %v1074 = vadd.f32 %v758, 1e-06
    %v1075 = vadd.f32 %v765, 1e-06
    %v1076 = vadd.f32 %v772, 1e-06
    %v1077 = vadd.f32 %v779, 1e-06
    %v1078 = vadd.f32 %v786, 1e-06
    %v1079 = vadd.f32 %v793, 1e-06
    %v1080 = vadd.f32 %v800, 1e-06
    %v1081 = vadd.f32 %v807, 1e-06
    %v1082 = vadd.f32 %v814, 1e-06
    %v1083 = vadd.f32 %v821, 1e-06
    %v1084 = vadd.f32 %v828, 1e-06
    %v1085 = vadd.f32 %v835, 1e-06
    %v1086 = vadd.f32 %v842, 1e-06
    %v1087 = vadd.f32 %v849, 1e-06
    %v1088 = vadd.f32 %v856, 1e-06
    %v1089 = vadd.f32 %v863, 1e-06
    %v1090 = vadd.f32 %v870, 1e-06
    %v1091 = vadd.f32 %v877, 1e-06
    %v1092 = vadd.f32 %v884, 1e-06
    %v1093 = vadd.f32 %v891, 1e-06
    %v1094 = vadd.f32 %v898, 1e-06
    %v1095 = vadd.f32 %v905, 1e-06
    %v1096 = vadd.f32 %v912, 1e-06
    %v1097 = vadd.f32 %v919, 1e-06
    %v1098 = vadd.f32 %v926, 1e-06
    %v1099 = vadd.f32 %v933, 1e-06
    %v1100 = vadd.f32 %v940, 1e-06
    %v1101 = vadd.f32 %v947, 1e-06
    %v1102 = vadd.f32 %v954, 1e-06
    %v1103 = vadd.f32 %v961, 1e-06
    %v1104 = vadd.f32 %v968, 1e-06
    %v1105 = vadd.f32 %v975, 1e-06
    %v1106 = vadd.f32 %v982, 1e-06
    %v1107 = vadd.f32 %v989, 1e-06
    %v1108 = vadd.f32 %v996, 1e-06
    %v1109 = vadd.f32 %v1003, 1e-06
    %v1110 = vadd.f32 %v1010, 1e-06
    %v1111 = vadd.f32 %v1017, 1e-06
    %v1112 = vadd.f32 %v1024, 1e-06
    %v1113 = vadd.f32 %v1031, 1e-06
    %v1114 = vadd.f32 %v1038, 1e-06
    %v1115 = vadd.f32 %v1045, 1e-06
    %v1116 = vadd.f32 %v1052, 1e-06
    %v1117 = vrcp.pop %v1053
    %v1118 = vmul.f32 1.0, %v1117
    %v1119 = vrcp.pop %v1054
    %v1120 = vmul.f32 1.0, %v1119
    %v1121 = vrcp.pop %v1055
    %v1122 = vmul.f32 1.0, %v1121
    %v1123 = vrcp.pop %v1056
    %v1124 = vmul.f32 1.0, %v1123
    %v1125 = vrcp.pop %v1057
    %v1126 = vmul.f32 1.0, %v1125
    %v1127 = vrcp.pop %v1058
    %v1128 = vmul.f32 1.0, %v1127
    %v1129 = vrcp.pop %v1059
    %v1130 = vmul.f32 1.0, %v1129
    %v1131 = vrcp.pop %v1060
    %v1132 = vmul.f32 1.0, %v1131
    %v1133 = vrcp.pop %v1061
    %v1134 = vmul.f32 1.0, %v1133
    %v1135 = vrcp.pop %v1062
    %v1136 = vmul.f32 1.0, %v1135
    %v1137 = vrcp.pop %v1063
    %v1138 = vmul.f32 1.0, %v1137
    %v1139 = vrcp.pop %v1064
    %v1140 = vmul.f32 1.0, %v1139
    %v1141 = vrcp.pop %v1065
    %v1142 = vmul.f32 1.0, %v1141
    %v1143 = vrcp.pop %v1066
    %v1144 = vmul.f32 1.0, %v1143
    %v1145 = vrcp.pop %v1067
    %v1146 = vmul.f32 1.0, %v1145
    %v1147 = vrcp.pop %v1068
    %v1148 = vmul.f32 1.0, %v1147
    %v1149 = vrcp.pop %v1069
    %v1150 = vmul.f32 1.0, %v1149
    %v1151 = vrcp.pop %v1070
    %v1152 = vmul.f32 1.0, %v1151
    %v1153 = vrcp.pop %v1071
    %v1154 = vmul.f32 1.0, %v1153
    %v1155 = vrcp.pop %v1072
    %v1156 = vmul.f32 1.0, %v1155
    %v1157 = vrcp.pop %v1073
    %v1158 = vmul.f32 1.0, %v1157
    %v1159 = vrcp.pop %v1074
    %v1160 = vmul.f32 1.0, %v1159
    %v1161 = vrcp.pop %v1075
    %v1162 = vmul.f32 1.0, %v1161
    %v1163 = vrcp.pop %v1076
    %v1164 = vmul.f32 1.0, %v1163
    %v1165 = vrcp.pop %v1077
    %v1166 = vmul.f32 1.0, %v1165
    %v1167 = vrcp.pop %v1078
    %v1168 = vmul.f32 1.0, %v1167
    %v1169 = vrcp.pop %v1079
    %v1170 = vmul.f32 1.0, %v1169
    %v1171 = vrcp.pop %v1080
    %v1172 = vmul.f32 1.0, %v1171
    %v1173 = vrcp.pop %v1081
    %v1174 = vmul.f32 1.0, %v1173
    %v1175 = vrcp.pop %v1082
    %v1176 = vmul.f32 1.0, %v1175
    %v1177 = vrcp.pop %v1083
    %v1178 = vmul.f32 1.0, %v1177
    %v1179 = vrcp.pop %v1084
    %v1180 = vmul.f32 1.0, %v1179
    %v1181 = vrcp.pop %v1085
    %v1182 = vmul.f32 1.0, %v1181
    %v1183 = vrcp.pop %v1086
    %v1184 = vmul.f32 1.0, %v1183
    %v1185 = vrcp.pop %v1087
    %v1186 = vmul.f32 1.0, %v1185
    %v1187 = vrcp.pop %v1088
    %v1188 = vmul.f32 1.0, %v1187
    %v1189 = vrcp.pop %v1089
    %v1190 = vmul.f32 1.0, %v1189
    %v1191 = vrcp.pop %v1090
    %v1192 = vmul.f32 1.0, %v1191
    %v1193 = vrcp.pop %v1091
    %v1194 = vmul.f32 1.0, %v1193
    %v1195 = vrcp.pop %v1092
    %v1196 = vmul.f32 1.0, %v1195
    %v1197 = vrcp.pop %v1093
    %v1198 = vmul.f32 1.0, %v1197
    %v1199 = vrcp.pop %v1094
    %v1200 = vmul.f32 1.0, %v1199
    %v1201 = vrcp.pop %v1095
    %v1202 = vmul.f32 1.0, %v1201
    %v1203 = vrcp.pop %v1096
    %v1204 = vmul.f32 1.0, %v1203
    %v1205 = vrcp.pop %v1097
    %v1206 = vmul.f32 1.0, %v1205
    %v1207 = vrcp.pop %v1098
    %v1208 = vmul.f32 1.0, %v1207
    %v1209 = vrcp.pop %v1099
    %v1210 = vmul.f32 1.0, %v1209
    %v1211 = vrcp.pop %v1100
    %v1212 = vmul.f32 1.0, %v1211
    %v1213 = vrcp.pop %v1101
    %v1214 = vmul.f32 1.0, %v1213
    %v1215 = vrcp.pop %v1102
    %v1216 = vmul.f32 1.0, %v1215
    %v1217 = vrcp.pop %v1103
    %v1218 = vmul.f32 1.0, %v1217
    %v1219 = vrcp.pop %v1104
    %v1220 = vmul.f32 1.0, %v1219
    %v1221 = vrcp.pop %v1105
    %v1222 = vmul.f32 1.0, %v1221
    %v1223 = vrcp.pop %v1106
    %v1224 = vmul.f32 1.0, %v1223
    %v1225 = vrcp.pop %v1107
    %v1226 = vmul.f32 1.0, %v1225
    %v1227 = vrcp.pop %v1108
    %v1228 = vmul.f32 1.0, %v1227
    %v1229 = vrcp.pop %v1109
    %v1230 = vmul.f32 1.0, %v1229
    %v1231 = vrcp.pop %v1110
    %v1232 = vmul.f32 1.0, %v1231
    %v1233 = vrcp.pop %v1111
    %v1234 = vmul.f32 1.0, %v1233
    %v1235 = vrcp.pop %v1112
    %v1236 = vmul.f32 1.0, %v1235
    %v1237 = vrcp.pop %v1113
    %v1238 = vmul.f32 1.0, %v1237
    %v1239 = vrcp.pop %v1114
    %v1240 = vmul.f32 1.0, %v1239
    %v1241 = vrcp.pop %v1115
    %v1242 = vmul.f32 1.0, %v1241
    %v1243 = vrcp.pop %v1116
    %v1244 = vmul.f32 1.0, %v1243
    %v1245 = vmul.f32 %v285, %v1118
    %v1246 = vmul.f32 %v286, %v1120
    %v1247 = vmul.f32 %v287, %v1122
    %v1248 = vmul.f32 %v288, %v1124
    %v1249 = vmul.f32 %v289, %v1126
    %v1250 = vmul.f32 %v290, %v1128
    %v1251 = vmul.f32 %v291, %v1130
    %v1252 = vmul.f32 %v292, %v1132
    %v1253 = vmul.f32 %v293, %v1134
    %v1254 = vmul.f32 %v294, %v1136
    %v1255 = vmul.f32 %v295, %v1138
    %v1256 = vmul.f32 %v296, %v1140
    %v1257 = vmul.f32 %v297, %v1142
    %v1258 = vmul.f32 %v298, %v1144
    %v1259 = vmul.f32 %v299, %v1146
    %v1260 = vmul.f32 %v300, %v1148
    %v1261 = vmul.f32 %v301, %v1150
    %v1262 = vmul.f32 %v302, %v1152
    %v1263 = vmul.f32 %v303, %v1154
    %v1264 = vmul.f32 %v304, %v1156
    %v1265 = vmul.f32 %v305, %v1158
    %v1266 = vmul.f32 %v306, %v1160
    %v1267 = vmul.f32 %v307, %v1162
    %v1268 = vmul.f32 %v308, %v1164
    %v1269 = vmul.f32 %v309, %v1166
    %v1270 = vmul.f32 %v310, %v1168
    %v1271 = vmul.f32 %v311, %v1170
    %v1272 = vmul.f32 %v312, %v1172
    %v1273 = vmul.f32 %v313, %v1174
    %v1274 = vmul.f32 %v314, %v1176
    %v1275 = vmul.f32 %v315, %v1178
    %v1276 = vmul.f32 %v316, %v1180
    %v1277 = vmul.f32 %v317, %v1182
    %v1278 = vmul.f32 %v318, %v1184
    %v1279 = vmul.f32 %v319, %v1186
    %v1280 = vmul.f32 %v320, %v1188
    %v1281 = vmul.f32 %v321, %v1190
    %v1282 = vmul.f32 %v322, %v1192
    %v1283 = vmul.f32 %v323, %v1194
    %v1284 = vmul.f32 %v324, %v1196
    %v1285 = vmul.f32 %v325, %v1198
    %v1286 = vmul.f32 %v326, %v1200
    %v1287 = vmul.f32 %v327, %v1202
    %v1288 = vmul.f32 %v328, %v1204
    %v1289 = vmul.f32 %v329, %v1206
    %v1290 = vmul.f32 %v330, %v1208
    %v1291 = vmul.f32 %v331, %v1210
    %v1292 = vmul.f32 %v332, %v1212
    %v1293 = vmul.f32 %v333, %v1214
    %v1294 = vmul.f32 %v334, %v1216
    %v1295 = vmul.f32 %v335, %v1218
    %v1296 = vmul.f32 %v336, %v1220
    %v1297 = vmul.f32 %v337, %v1222
    %v1298 = vmul.f32 %v338, %v1224
    %v1299 = vmul.f32 %v339, %v1226
    %v1300 = vmul.f32 %v340, %v1228
    %v1301 = vmul.f32 %v341, %v1230
    %v1302 = vmul.f32 %v342, %v1232
    %v1303 = vmul.f32 %v343, %v1234
    %v1304 = vmul.f32 %v344, %v1236
    %v1305 = vmul.f32 %v345, %v1238
    %v1306 = vmul.f32 %v346, %v1240
    %v1307 = vmul.f32 %v347, %v1242
    %v1308 = vmul.f32 %v348, %v1244
    %v1309 = vld [vmem:[%s1] sm:$0x1]
    %v1311 = vlaneseq
    %v1312 = vshrl.u32 %v1311, 7
    %v1313 = vsub.s32 0, %v1312
    %v1314 = vrot.slane %v1309, %v1313
    %v1316 = vmul.f32 %v1245, %v1314
    %v1317 = vmul.f32 %v1246, %v1314
    %v1318 = vmul.f32 %v1247, %v1314
    %v1319 = vmul.f32 %v1248, %v1314
    %v1320 = vmul.f32 %v1249, %v1314
    %v1321 = vmul.f32 %v1250, %v1314
    %v1322 = vmul.f32 %v1251, %v1314
    %v1323 = vmul.f32 %v1252, %v1314
    %v1324 = vmul.f32 %v1253, %v1314
    %v1325 = vmul.f32 %v1254, %v1314
    %v1326 = vmul.f32 %v1255, %v1314
    %v1327 = vmul.f32 %v1256, %v1314
    %v1328 = vmul.f32 %v1257, %v1314
    %v1329 = vmul.f32 %v1258, %v1314
    %v1330 = vmul.f32 %v1259, %v1314
    %v1331 = vmul.f32 %v1260, %v1314
    %v1332 = vmul.f32 %v1261, %v1314
    %v1333 = vmul.f32 %v1262, %v1314
    %v1334 = vmul.f32 %v1263, %v1314
    %v1335 = vmul.f32 %v1264, %v1314
    %v1336 = vmul.f32 %v1265, %v1314
    %v1337 = vmul.f32 %v1266, %v1314
    %v1338 = vmul.f32 %v1267, %v1314
    %v1339 = vmul.f32 %v1268, %v1314
    %v1340 = vmul.f32 %v1269, %v1314
    %v1341 = vmul.f32 %v1270, %v1314
    %v1342 = vmul.f32 %v1271, %v1314
    %v1343 = vmul.f32 %v1272, %v1314
    %v1344 = vmul.f32 %v1273, %v1314
    %v1345 = vmul.f32 %v1274, %v1314
    %v1346 = vmul.f32 %v1275, %v1314
    %v1347 = vmul.f32 %v1276, %v1314
    %v1348 = vmul.f32 %v1277, %v1314
    %v1349 = vmul.f32 %v1278, %v1314
    %v1350 = vmul.f32 %v1279, %v1314
    %v1351 = vmul.f32 %v1280, %v1314
    %v1352 = vmul.f32 %v1281, %v1314
    %v1353 = vmul.f32 %v1282, %v1314
    %v1354 = vmul.f32 %v1283, %v1314
    %v1355 = vmul.f32 %v1284, %v1314
    %v1356 = vmul.f32 %v1285, %v1314
    %v1357 = vmul.f32 %v1286, %v1314
    %v1358 = vmul.f32 %v1287, %v1314
    %v1359 = vmul.f32 %v1288, %v1314
    %v1360 = vmul.f32 %v1289, %v1314
    %v1361 = vmul.f32 %v1290, %v1314
    %v1362 = vmul.f32 %v1291, %v1314
    %v1363 = vmul.f32 %v1292, %v1314
    %v1364 = vmul.f32 %v1293, %v1314
    %v1365 = vmul.f32 %v1294, %v1314
    %v1366 = vmul.f32 %v1295, %v1314
    %v1367 = vmul.f32 %v1296, %v1314
    %v1368 = vmul.f32 %v1297, %v1314
    %v1369 = vmul.f32 %v1298, %v1314
    %v1370 = vmul.f32 %v1299, %v1314
    %v1371 = vmul.f32 %v1300, %v1314
    %v1372 = vmul.f32 %v1301, %v1314
    %v1373 = vmul.f32 %v1302, %v1314
    %v1374 = vmul.f32 %v1303, %v1314
    %v1375 = vmul.f32 %v1304, %v1314
    %v1376 = vmul.f32 %v1305, %v1314
    %v1377 = vmul.f32 %v1306, %v1314
    %v1378 = vmul.f32 %v1307, %v1314
    %v1379 = vmul.f32 %v1308, %v1314
    %v1380 = vld [vmem:[%s2] sm:$0x1]
    %v1382 = vlaneseq
    %v1383 = vshrl.u32 %v1382, 7
    %v1384 = vsub.s32 0, %v1383
    %v1385 = vrot.slane %v1380, %v1384
    %v1387 = vadd.f32 %v1316, %v1385
    %v1388 = vadd.f32 %v1317, %v1385
    %v1389 = vadd.f32 %v1318, %v1385
    %v1390 = vadd.f32 %v1319, %v1385
    %v1391 = vadd.f32 %v1320, %v1385
    %v1392 = vadd.f32 %v1321, %v1385
    %v1393 = vadd.f32 %v1322, %v1385
    %v1394 = vadd.f32 %v1323, %v1385
    %v1395 = vadd.f32 %v1324, %v1385
    %v1396 = vadd.f32 %v1325, %v1385
    %v1397 = vadd.f32 %v1326, %v1385
    %v1398 = vadd.f32 %v1327, %v1385
    %v1399 = vadd.f32 %v1328, %v1385
    %v1400 = vadd.f32 %v1329, %v1385
    %v1401 = vadd.f32 %v1330, %v1385
    %v1402 = vadd.f32 %v1331, %v1385
    %v1403 = vadd.f32 %v1332, %v1385
    %v1404 = vadd.f32 %v1333, %v1385
    %v1405 = vadd.f32 %v1334, %v1385
    %v1406 = vadd.f32 %v1335, %v1385
    %v1407 = vadd.f32 %v1336, %v1385
    %v1408 = vadd.f32 %v1337, %v1385
    %v1409 = vadd.f32 %v1338, %v1385
    %v1410 = vadd.f32 %v1339, %v1385
    %v1411 = vadd.f32 %v1340, %v1385
    %v1412 = vadd.f32 %v1341, %v1385
    %v1413 = vadd.f32 %v1342, %v1385
    %v1414 = vadd.f32 %v1343, %v1385
    %v1415 = vadd.f32 %v1344, %v1385
    %v1416 = vadd.f32 %v1345, %v1385
    %v1417 = vadd.f32 %v1346, %v1385
    %v1418 = vadd.f32 %v1347, %v1385
    %v1419 = vadd.f32 %v1348, %v1385
    %v1420 = vadd.f32 %v1349, %v1385
    %v1421 = vadd.f32 %v1350, %v1385
    %v1422 = vadd.f32 %v1351, %v1385
    %v1423 = vadd.f32 %v1352, %v1385
    %v1424 = vadd.f32 %v1353, %v1385
    %v1425 = vadd.f32 %v1354, %v1385
    %v1426 = vadd.f32 %v1355, %v1385
    %v1427 = vadd.f32 %v1356, %v1385
    %v1428 = vadd.f32 %v1357, %v1385
    %v1429 = vadd.f32 %v1358, %v1385
    %v1430 = vadd.f32 %v1359, %v1385
    %v1431 = vadd.f32 %v1360, %v1385
    %v1432 = vadd.f32 %v1361, %v1385
    %v1433 = vadd.f32 %v1362, %v1385
    %v1434 = vadd.f32 %v1363, %v1385
    %v1435 = vadd.f32 %v1364, %v1385
    %v1436 = vadd.f32 %v1365, %v1385
    %v1437 = vadd.f32 %v1366, %v1385
    %v1438 = vadd.f32 %v1367, %v1385
    %v1439 = vadd.f32 %v1368, %v1385
    %v1440 = vadd.f32 %v1369, %v1385
    %v1441 = vadd.f32 %v1370, %v1385
    %v1442 = vadd.f32 %v1371, %v1385
    %v1443 = vadd.f32 %v1372, %v1385
    %v1444 = vadd.f32 %v1373, %v1385
    %v1445 = vadd.f32 %v1374, %v1385
    %v1446 = vadd.f32 %v1375, %v1385
    %v1447 = vadd.f32 %v1376, %v1385
    %v1448 = vadd.f32 %v1377, %v1385
    %v1449 = vadd.f32 %v1378, %v1385
    %v1450 = vadd.f32 %v1379, %v1385
    %1451 = vst [vmem:[#allocation5] sm:$0xff] %v1387
    %1452 = vst [vmem:[#allocation5 + $0x8] sm:$0xff] %v1388
    %1453 = vst [vmem:[#allocation5 + $0x10] sm:$0xff] %v1389
    %1454 = vst [vmem:[#allocation5 + $0x18] sm:$0xff] %v1390
    %1455 = vst [vmem:[#allocation5 + $0x20] sm:$0xff] %v1391
    %1456 = vst [vmem:[#allocation5 + $0x28] sm:$0xff] %v1392
    %1457 = vst [vmem:[#allocation5 + $0x30] sm:$0xff] %v1393
    %1458 = vst [vmem:[#allocation5 + $0x38] sm:$0xff] %v1394
    %1459 = vst [vmem:[#allocation5 + $0x40] sm:$0xff] %v1395
    %1460 = vst [vmem:[#allocation5 + $0x48] sm:$0xff] %v1396
    %1461 = vst [vmem:[#allocation5 + $0x50] sm:$0xff] %v1397
    %1462 = vst [vmem:[#allocation5 + $0x58] sm:$0xff] %v1398
    %1463 = vst [vmem:[#allocation5 + $0x60] sm:$0xff] %v1399
    %1464 = vst [vmem:[#allocation5 + $0x68] sm:$0xff] %v1400
    %1465 = vst [vmem:[#allocation5 + $0x70] sm:$0xff] %v1401
    %1466 = vst [vmem:[#allocation5 + $0x78] sm:$0xff] %v1402
    %1467 = vst [vmem:[#allocation5 + $0x80] sm:$0xff] %v1403
    %1468 = vst [vmem:[#allocation5 + $0x88] sm:$0xff] %v1404
    %1469 = vst [vmem:[#allocation5 + $0x90] sm:$0xff] %v1405
    %1470 = vst [vmem:[#allocation5 + $0x98] sm:$0xff] %v1406
    %1471 = vst [vmem:[#allocation5 + $0xa0] sm:$0xff] %v1407
    %1472 = vst [vmem:[#allocation5 + $0xa8] sm:$0xff] %v1408
    %1473 = vst [vmem:[#allocation5 + $0xb0] sm:$0xff] %v1409
    %1474 = vst [vmem:[#allocation5 + $0xb8] sm:$0xff] %v1410
    %1475 = vst [vmem:[#allocation5 + $0xc0] sm:$0xff] %v1411
    %1476 = vst [vmem:[#allocation5 + $0xc8] sm:$0xff] %v1412
    %1477 = vst [vmem:[#allocation5 + $0xd0] sm:$0xff] %v1413
    %1478 = vst [vmem:[#allocation5 + $0xd8] sm:$0xff] %v1414
    %1479 = vst [vmem:[#allocation5 + $0xe0] sm:$0xff] %v1415
    %1480 = vst [vmem:[#allocation5 + $0xe8] sm:$0xff] %v1416
    %1481 = vst [vmem:[#allocation5 + $0xf0] sm:$0xff] %v1417
    %1482 = vst [vmem:[#allocation5 + $0xf8] sm:$0xff] %v1418
    %1483 = vst [vmem:[#allocation5 + $0x100] sm:$0xff] %v1419
    %1484 = vst [vmem:[#allocation5 + $0x108] sm:$0xff] %v1420
    %1485 = vst [vmem:[#allocation5 + $0x110] sm:$0xff] %v1421
    %1486 = vst [vmem:[#allocation5 + $0x118] sm:$0xff] %v1422
    %1487 = vst [vmem:[#allocation5 + $0x120] sm:$0xff] %v1423
    %1488 = vst [vmem:[#allocation5 + $0x128] sm:$0xff] %v1424
    %1489 = vst [vmem:[#allocation5 + $0x130] sm:$0xff] %v1425
    %1490 = vst [vmem:[#allocation5 + $0x138] sm:$0xff] %v1426
    %1491 = vst [vmem:[#allocation5 + $0x140] sm:$0xff] %v1427
    %1492 = vst [vmem:[#allocation5 + $0x148] sm:$0xff] %v1428
    %1493 = vst [vmem:[#allocation5 + $0x150] sm:$0xff] %v1429
    %1494 = vst [vmem:[#allocation5 + $0x158] sm:$0xff] %v1430
    %1495 = vst [vmem:[#allocation5 + $0x160] sm:$0xff] %v1431
    %1496 = vst [vmem:[#allocation5 + $0x168] sm:$0xff] %v1432
    %1497 = vst [vmem:[#allocation5 + $0x170] sm:$0xff] %v1433
    %1498 = vst [vmem:[#allocation5 + $0x178] sm:$0xff] %v1434
    %1499 = vst [vmem:[#allocation5 + $0x180] sm:$0xff] %v1435
    %1500 = vst [vmem:[#allocation5 + $0x188] sm:$0xff] %v1436
    %1501 = vst [vmem:[#allocation5 + $0x190] sm:$0xff] %v1437
    %1502 = vst [vmem:[#allocation5 + $0x198] sm:$0xff] %v1438
    %1503 = vst [vmem:[#allocation5 + $0x1a0] sm:$0xff] %v1439
    %1504 = vst [vmem:[#allocation5 + $0x1a8] sm:$0xff] %v1440
    %1505 = vst [vmem:[#allocation5 + $0x1b0] sm:$0xff] %v1441
    %1506 = vst [vmem:[#allocation5 + $0x1b8] sm:$0xff] %v1442
    %1507 = vst [vmem:[#allocation5 + $0x1c0] sm:$0xff] %v1443
    %1508 = vst [vmem:[#allocation5 + $0x1c8] sm:$0xff] %v1444
    %1509 = vst [vmem:[#allocation5 + $0x1d0] sm:$0xff] %v1445
    %1510 = vst [vmem:[#allocation5 + $0x1d8] sm:$0xff] %v1446
    %1511 = vst [vmem:[#allocation5 + $0x1e0] sm:$0xff] %v1447
    %1512 = vst [vmem:[#allocation5 + $0x1e8] sm:$0xff] %v1448
    %1513 = vst [vmem:[#allocation5 + $0x1f0] sm:$0xff] %v1449
    %1514 = vst [vmem:[#allocation5 + $0x1f8] sm:$0xff] %v1450
    // Predicated region
    $region18: #{tpu_custom_call.1} parent=1 // pred_check
      _
    $region19: #{tpu_custom_call.1} parent=1 // pred_check_branch
      %1516 = sbr.rel (0) target = $region21
    $region20: #{tpu_custom_call.1} parent=1 // pred_region
      %s1518 = ssub.s32 8192, 8192
      %1519 = vsyncadd [#allocation4], %s1518
      %s1520 = sshll.u32 [#allocation5], 4
      %s1521 = int_to_ptr.vmem [resolvable:$true] %s1520
      %1526 = dma.vmem_to_hbm [thread:$0]  %s1521, 8192, %s3, [#allocation4], 128, 128, 8
    $region21: #{tpu_custom_call.1} parent=1 // pred_fallthru
      _
    // Predicated region
    $region22: #{tpu_custom_call.1} parent=1 // pred_check
      _
    $region23: #{tpu_custom_call.1} parent=1 // pred_check_branch
      %1528 = sbr.rel (0) target = $region25
    $region24: #{tpu_custom_call.1} parent=1 // pred_region
      %1529 = dma.done [#allocation4], 8192
    $region25: #{tpu_custom_call.1} parent=1 // pred_fallthru
      _
    %1530 = vsyncpa [#allocation3], 1
    %1531 = vsyncpa [#allocation4], 1

</llo_original>
